<compile_context>
chip_gen: v6e
topology: v6e:2x2x1
jax: 0.10.0
libtpu: 0.0.40
codegen_flags: <defaults>
</compile_context>

<pallas_src>
import functools

import jax
import jax.numpy as jnp
from jax.experimental import pallas as pl
from jax.experimental.pallas import tpu as pltpu

NEG_INF = -1e30

N_NODES = 128
NUM_FEATURES = 16
NUM_CLASSES = 8
HIDDEN = 16
HEADS1 = 2
NUM_EDGES = 512


def _masked_softmax(logits, mask_bias):
    """LeakyReLU(0.2) -> additive mask -> row softmax (sources on lanes)."""
    e = jnp.maximum(logits, 0.2 * logits) + mask_bias        # LeakyReLU + mask
    m = jnp.max(e, axis=-1, keepdims=True)
    p = jnp.exp(e - m)                                       # exactly 0 on non-edges
    denom = jnp.sum(p, axis=-1, keepdims=True)
    inv = pl.reciprocal(jnp.maximum(denom, 1e-20), approx=True)   # EUP slot
    return p * inv


def _fused_gat_kernel(x_ref, w1_ref, asrc1_ref, adst1_ref, hsel_ref, b1_ref,
                      w2_ref, asrc2_ref, adst2_ref, b2_ref, adj_ref,
                      out_ref, *, heads1):
    f32, bf16 = jnp.float32, jnp.bfloat16

    # Additive mask built once in-kernel and reused by all three softmaxes:
    # 0 on edges (self-loops included), -1e30 on non-edges.
    mask_bias = jnp.where(adj_ref[...] > 0.0, 0.0, NEG_INF)  # [N, N]

    # ---------------- layer 1: GATConv(Fin, 16, heads=2, concat) + ReLU -----
    h1 = jnp.dot(x_ref[...].astype(bf16), w1_ref[...].astype(bf16),
                 preferred_element_type=f32)                 # [N, H*C]

    # Attention logits for all heads via two block matmuls (att matrices are
    # zero-padded to [H, H*C] in the wrapper) — no per-head lane slicing.
    a_src = jax.lax.dot_general(asrc1_ref[...], h1, (((1,), (1,)), ((), ())),
                                preferred_element_type=f32)  # [H, N]
    a_dst = jax.lax.dot_general(h1, adst1_ref[...], (((1,), (1,)), ((), ())),
                                preferred_element_type=f32)  # [N, H]

    n = x_ref.shape[0]
    acc1 = jnp.zeros((n, h1.shape[1]), f32)                  # [N, H*C]
    for hd in range(heads1):                                 # static unroll (H=2)
        logits = a_dst[:, hd:hd + 1] + a_src[hd:hd + 1, :]   # [N, N]
        alpha = _masked_softmax(logits, mask_bias)           # [N, N]
        h_blk = h1 * hsel_ref[hd:hd + 1, :]                  # zero other head's cols
        acc1 = acc1 + jnp.dot(alpha.astype(bf16), h_blk.astype(bf16),
                              preferred_element_type=f32)    # concat-by-columns
    # TODO(synk): attention dropout (p=0.2) is identity in eval mode.

    out1 = jnp.maximum(acc1 + b1_ref[...], 0.0)              # bias + fused ReLU
    # TODO(synk): F.dropout between layers is identity (eval-mode semantics).

    # ---------------- layer 2: GATConv(32, C, heads=1, concat=False) --------
    h2 = jnp.dot(out1.astype(bf16), w2_ref[...].astype(bf16),
                 preferred_element_type=f32)                 # [N, C2]
    a_src2 = jax.lax.dot_general(asrc2_ref[...], h2, (((1,), (1,)), ((), ())),
                                 preferred_element_type=f32)  # [1, N]
    a_dst2 = jax.lax.dot_general(h2, adst2_ref[...], (((1,), (1,)), ((), ())),
                                 preferred_element_type=f32)  # [N, 1]
    alpha2 = _masked_softmax(a_dst2 + a_src2, mask_bias)      # [N, N]
    out2 = jnp.dot(alpha2.astype(bf16), h2.astype(bf16),
                   preferred_element_type=f32)                # [N, C2]
    out2 = out2 + b2_ref[...]

    # fused log_softmax(dim=1)
    mx = jnp.max(out2, axis=-1, keepdims=True)
    z = out2 - mx
    out_ref[...] = z - jnp.log(jnp.sum(jnp.exp(z), axis=-1, keepdims=True))


def _block_rows(att):
    """[H, C] -> [H, H*C] with att[h] placed at columns h*C:(h+1)*C, zeros elsewhere."""
    h, c = att.shape
    eye = jnp.eye(h, dtype=att.dtype)
    return (eye[:, :, None] * att[:, None, :]).reshape(h, h * c)


@jax.jit
def gat_forward(x, adj, params):
    n = x.shape[0]
    # Zero-padded block attention matrices and head-selection mask (tiny,
    # fused into the same dispatch by jit).
    att_src1_blk = _block_rows(params["att_src1"])            # [H, H*C]
    att_dst1_blk = _block_rows(params["att_dst1"])            # [H, H*C]
    head_sel = jnp.repeat(jnp.eye(HEADS1, dtype=jnp.float32), HIDDEN, axis=1)

    kernel = functools.partial(_fused_gat_kernel, heads1=HEADS1)
    vmem = lambda: pl.BlockSpec(memory_space=pltpu.MemorySpace.VMEM)

    return pl.pallas_call(
        kernel,
        out_shape=jax.ShapeDtypeStruct((n, NUM_CLASSES), jnp.float32),
        in_specs=[vmem() for _ in range(11)],
        out_specs=vmem(),
    )(x, params["w1"], att_src1_blk, att_dst1_blk, head_sel, params["bias1"],
      params["w2"], params["att_src2"], params["att_dst2"], params["bias2"],
      adj)


# ---------------- pure-JAX (f32) reference for sanity check ----------------
def _gat_conv_ref(x, adj, w, att_src, att_dst, bias, heads, out_ch, concat):
    h = (x @ w).reshape(-1, heads, out_ch)                    # [N, H, C]
    a_s = jnp.sum(h * att_src[None], axis=-1)                 # [N, H]
    a_d = jnp.sum(h * att_dst[None], axis=-1)                 # [N, H]
    e = a_d[:, None, :] + a_s[None, :, :]                     # [N, N, H]
    e = jnp.where(e >= 0, e, 0.2 * e)
    mask = (adj > 0)[:, :, None]
    e = jnp.where(mask, e, NEG_INF)
    alpha = jax.nn.softmax(e, axis=1)
    alpha = jnp.where(mask, alpha, 0.0)
    out = jnp.einsum('ijh,jhc->ihc', alpha, h)
    out = out.reshape(-1, heads * out_ch) if concat else out.mean(axis=1)
    return out + bias[0]


def _gat_forward_ref(x, adj, params):
    h = jax.nn.relu(_gat_conv_ref(x, adj, params["w1"], params["att_src1"],
                                  params["att_dst1"], params["bias1"],
                                  HEADS1, HIDDEN, True))
    out = _gat_conv_ref(h, adj, params["w2"], params["att_src2"],
                        params["att_dst2"], params["bias2"],
                        1, NUM_CLASSES, False)
    return jax.nn.log_softmax(out, axis=1)


if __name__ == "__main__":
    key = jax.random.PRNGKey(0)
    k_x, k_src, k_dst, k1, k2, k3, k4, k5, k6 = jax.random.split(key, 9)

    # Inputs (data.x, data.edge_index)
    x = jax.random.normal(k_x, (N_NODES, NUM_FEATURES), dtype=jnp.float32)
    src = jax.random.randint(k_src, (NUM_EDGES,), 0, N_NODES)
    dst = jax.random.randint(k_dst, (NUM_EDGES,), 0, N_NODES)
    edge_index = jnp.stack([src, dst], axis=0)                # [2, E]

    # Dense adjacency: adj[i, j] = 1 iff edge j -> i; add self loops (GATConv default).
    adj = jnp.zeros((N_NODES, N_NODES), jnp.float32)
    adj = adj.at[edge_index[1], edge_index[0]].set(1.0)
    adj = adj.at[jnp.arange(N_NODES), jnp.arange(N_NODES)].set(1.0)

    # Deterministic parameter init (shapes per GATConv(in, out, heads)).
    params = {
        "w1": 0.2 * jax.random.normal(k1, (NUM_FEATURES, HEADS1 * HIDDEN), jnp.float32),
        "att_src1": 0.2 * jax.random.normal(k2, (HEADS1, HIDDEN), jnp.float32),
        "att_dst1": 0.2 * jax.random.normal(k3, (HEADS1, HIDDEN), jnp.float32),
        "bias1": jnp.zeros((1, HEADS1 * HIDDEN), jnp.float32),
        "w2": 0.2 * jax.random.normal(k4, (HEADS1 * HIDDEN, NUM_CLASSES), jnp.float32),
        "att_src2": 0.2 * jax.random.normal(k5, (1, NUM_CLASSES), jnp.float32),
        "att_dst2": 0.2 * jax.random.normal(k6, (1, NUM_CLASSES), jnp.float32),
        "bias2": jnp.zeros((1, NUM_CLASSES), jnp.float32),
    }

    out = jax.block_until_ready(gat_forward(x, adj, params))
    ref = jax.block_until_ready(_gat_forward_ref(x, adj, params))

    assert out.shape == (N_NODES, NUM_CLASSES)
    # Tolerance accounts for intentional bf16 MXU operands (f32 accumulation)
    # and the approx EUP reciprocal in the softmax; reference is pure f32.
    assert jnp.allclose(out, ref, atol=3e-2, rtol=3e-2), "mismatch vs reference"
    print("KERNEL_OK")
</pallas_src>

<mosaic_0001>
module attributes {stable_mosaic.version = 11 : i64} {
  func.func @_fused_gat_kernel(%arg0: memref<128x16xf32, #tpu.memory_space<vmem>>, %arg1: memref<16x32xf32, #tpu.memory_space<vmem>>, %arg2: memref<2x32xf32, #tpu.memory_space<vmem>>, %arg3: memref<2x32xf32, #tpu.memory_space<vmem>>, %arg4: memref<2x32xf32, #tpu.memory_space<vmem>>, %arg5: memref<1x32xf32, #tpu.memory_space<vmem>>, %arg6: memref<32x8xf32, #tpu.memory_space<vmem>>, %arg7: memref<1x8xf32, #tpu.memory_space<vmem>>, %arg8: memref<1x8xf32, #tpu.memory_space<vmem>>, %arg9: memref<1x8xf32, #tpu.memory_space<vmem>>, %arg10: memref<128x128xf32, #tpu.memory_space<vmem>>, %arg11: memref<128x8xf32, #tpu.memory_space<vmem>>) attributes {dimension_semantics = [], scalar_prefetch = 0 : i64, scratch_operands = 0 : i64, tpu.core_type = #tpu.core_type<tc>} {
    %c0 = arith.constant 0 : index
    %c0_0 = arith.constant 0 : index
    %0 = vector.load %arg10[%c0, %c0_0] : memref<128x128xf32, #tpu.memory_space<vmem>>, vector<128x128xf32>
    %cst = arith.constant 0.000000e+00 : f32
    %1 = vector.broadcast %cst : f32 to vector<128x128xf32>
    %2 = arith.cmpf ogt, %0, %1 : vector<128x128xf32>
    %cst_1 = arith.constant 0.000000e+00 : f32
    %cst_2 = arith.constant -1.000000e+30 : f32
    %3 = vector.broadcast %cst_1 : f32 to vector<128x128xf32>
    %4 = vector.broadcast %cst_2 : f32 to vector<128x128xf32>
    %5 = arith.select %2, %3, %4 : vector<128x128xi1>, vector<128x128xf32>
    %c0_3 = arith.constant 0 : index
    %c0_4 = arith.constant 0 : index
    %6 = vector.load %arg0[%c0_3, %c0_4] : memref<128x16xf32, #tpu.memory_space<vmem>>, vector<128x16xf32>
    %7 = arith.truncf %6 : vector<128x16xf32> to vector<128x16xbf16>
    %c0_5 = arith.constant 0 : index
    %c0_6 = arith.constant 0 : index
    %8 = vector.load %arg1[%c0_5, %c0_6] : memref<16x32xf32, #tpu.memory_space<vmem>>, vector<16x32xf32>
    %9 = arith.truncf %8 : vector<16x32xf32> to vector<16x32xbf16>
    %cst_7 = arith.constant dense<0.000000e+00> : vector<128x32xf32>
    %10 = tpu.matmul %7, %9, %cst_7 {dimension_numbers = #tpu.dot_dimension_numbers<[1], [0], [0], [1], [0, 0, 1, 1], [], []>} : vector<128x16xbf16>, vector<16x32xbf16>, vector<128x32xf32> -> vector<128x32xf32>
    %c0_8 = arith.constant 0 : index
    %c0_9 = arith.constant 0 : index
    %11 = vector.load %arg2[%c0_8, %c0_9] : memref<2x32xf32, #tpu.memory_space<vmem>>, vector<2x32xf32>
    %cst_10 = arith.constant dense<0.000000e+00> : vector<2x128xf32>
    %12 = tpu.matmul %11, %10, %cst_10 {dimension_numbers = #tpu.dot_dimension_numbers<[1], [1], [0], [0], [0, 0, 1, 0], [], []>} : vector<2x32xf32>, vector<128x32xf32>, vector<2x128xf32> -> vector<2x128xf32>
    %c0_11 = arith.constant 0 : index
    %c0_12 = arith.constant 0 : index
    %13 = vector.load %arg3[%c0_11, %c0_12] : memref<2x32xf32, #tpu.memory_space<vmem>>, vector<2x32xf32>
    %cst_13 = arith.constant dense<0.000000e+00> : vector<128x2xf32>
    %14 = tpu.matmul %10, %13, %cst_13 {dimension_numbers = #tpu.dot_dimension_numbers<[1], [1], [0], [0], [0, 0, 1, 0], [], []>} : vector<128x32xf32>, vector<2x32xf32>, vector<128x2xf32> -> vector<128x2xf32>
    %cst_14 = arith.constant 0.000000e+00 : f32
    %15 = vector.broadcast %cst_14 : f32 to vector<128x32xf32>
    %16 = vector.extract_strided_slice %14 {offsets = [0, 0], sizes = [128, 1], strides = [1, 1]} : vector<128x2xf32> to vector<128x1xf32>
    %17 = vector.extract_strided_slice %12 {offsets = [0, 0], sizes = [1, 128], strides = [1, 1]} : vector<2x128xf32> to vector<1x128xf32>
    %18 = vector.broadcast %16 : vector<128x1xf32> to vector<128x128xf32>
    %19 = vector.broadcast %17 : vector<1x128xf32> to vector<128x128xf32>
    %20 = arith.addf %18, %19 : vector<128x128xf32>
    %cst_15 = arith.constant 2.000000e-01 : f32
    %21 = vector.broadcast %cst_15 : f32 to vector<128x128xf32>
    %22 = arith.mulf %21, %20 : vector<128x128xf32>
    %23 = arith.maximumf %20, %22 : vector<128x128xf32>
    %24 = arith.addf %23, %5 : vector<128x128xf32>
    %cst_16 = arith.constant dense<0xFF800000> : vector<128xf32>
    %25 = vector.multi_reduction <maximumf>, %24, %cst_16 [1] : vector<128x128xf32> to vector<128xf32>
    %26 = vector.shape_cast %25 : vector<128xf32> to vector<128x1xf32>
    %27 = vector.broadcast %26 : vector<128x1xf32> to vector<128x128xf32>
    %28 = arith.subf %24, %27 : vector<128x128xf32>
    %29 = math.exp %28 : vector<128x128xf32>
    %cst_17 = arith.constant dense<0.000000e+00> : vector<128xf32>
    %30 = vector.multi_reduction <add>, %29, %cst_17 [1] : vector<128x128xf32> to vector<128xf32>
    %31 = vector.shape_cast %30 : vector<128xf32> to vector<128x1xf32>
    %cst_18 = arith.constant 9.99999968E-21 : f32
    %32 = vector.broadcast %cst_18 : f32 to vector<128x1xf32>
    %33 = arith.maximumf %31, %32 : vector<128x1xf32>
    %34 = tpu.reciprocal %33 {approx = true} : vector<128x1xf32> -> vector<128x1xf32>
    %35 = vector.broadcast %34 : vector<128x1xf32> to vector<128x128xf32>
    %36 = arith.mulf %29, %35 : vector<128x128xf32>
    %c0_19 = arith.constant 0 : index
    %c0_20 = arith.constant 0 : index
    %37 = vector.load %arg4[%c0_19, %c0_20] : memref<2x32xf32, #tpu.memory_space<vmem>>, vector<1x32xf32>
    %38 = vector.broadcast %37 : vector<1x32xf32> to vector<128x32xf32>
    %39 = arith.mulf %10, %38 : vector<128x32xf32>
    %40 = arith.truncf %36 : vector<128x128xf32> to vector<128x128xbf16>
    %41 = arith.truncf %39 : vector<128x32xf32> to vector<128x32xbf16>
    %cst_21 = arith.constant dense<0.000000e+00> : vector<128x32xf32>
    %42 = tpu.matmul %40, %41, %cst_21 {dimension_numbers = #tpu.dot_dimension_numbers<[1], [0], [0], [1], [0, 0, 1, 1], [], []>} : vector<128x128xbf16>, vector<128x32xbf16>, vector<128x32xf32> -> vector<128x32xf32>
    %43 = arith.addf %15, %42 : vector<128x32xf32>
    %44 = vector.extract_strided_slice %14 {offsets = [0, 1], sizes = [128, 1], strides = [1, 1]} : vector<128x2xf32> to vector<128x1xf32>
    %45 = vector.extract_strided_slice %12 {offsets = [1, 0], sizes = [1, 128], strides = [1, 1]} : vector<2x128xf32> to vector<1x128xf32>
    %46 = vector.broadcast %44 : vector<128x1xf32> to vector<128x128xf32>
    %47 = vector.broadcast %45 : vector<1x128xf32> to vector<128x128xf32>
    %48 = arith.addf %46, %47 : vector<128x128xf32>
    %cst_22 = arith.constant 2.000000e-01 : f32
    %49 = vector.broadcast %cst_22 : f32 to vector<128x128xf32>
    %50 = arith.mulf %49, %48 : vector<128x128xf32>
    %51 = arith.maximumf %48, %50 : vector<128x128xf32>
    %52 = arith.addf %51, %5 : vector<128x128xf32>
    %cst_23 = arith.constant dense<0xFF800000> : vector<128xf32>
    %53 = vector.multi_reduction <maximumf>, %52, %cst_23 [1] : vector<128x128xf32> to vector<128xf32>
    %54 = vector.shape_cast %53 : vector<128xf32> to vector<128x1xf32>
    %55 = vector.broadcast %54 : vector<128x1xf32> to vector<128x128xf32>
    %56 = arith.subf %52, %55 : vector<128x128xf32>
    %57 = math.exp %56 : vector<128x128xf32>
    %cst_24 = arith.constant dense<0.000000e+00> : vector<128xf32>
    %58 = vector.multi_reduction <add>, %57, %cst_24 [1] : vector<128x128xf32> to vector<128xf32>
    %59 = vector.shape_cast %58 : vector<128xf32> to vector<128x1xf32>
    %cst_25 = arith.constant 9.99999968E-21 : f32
    %60 = vector.broadcast %cst_25 : f32 to vector<128x1xf32>
    %61 = arith.maximumf %59, %60 : vector<128x1xf32>
    %62 = tpu.reciprocal %61 {approx = true} : vector<128x1xf32> -> vector<128x1xf32>
    %63 = vector.broadcast %62 : vector<128x1xf32> to vector<128x128xf32>
    %64 = arith.mulf %57, %63 : vector<128x128xf32>
    %c1 = arith.constant 1 : index
    %c0_26 = arith.constant 0 : index
    %65 = vector.load %arg4[%c1, %c0_26] : memref<2x32xf32, #tpu.memory_space<vmem>>, vector<1x32xf32>
    %66 = vector.broadcast %65 : vector<1x32xf32> to vector<128x32xf32>
    %67 = arith.mulf %10, %66 : vector<128x32xf32>
    %68 = arith.truncf %64 : vector<128x128xf32> to vector<128x128xbf16>
    %69 = arith.truncf %67 : vector<128x32xf32> to vector<128x32xbf16>
    %cst_27 = arith.constant dense<0.000000e+00> : vector<128x32xf32>
    %70 = tpu.matmul %68, %69, %cst_27 {dimension_numbers = #tpu.dot_dimension_numbers<[1], [0], [0], [1], [0, 0, 1, 1], [], []>} : vector<128x128xbf16>, vector<128x32xbf16>, vector<128x32xf32> -> vector<128x32xf32>
    %71 = arith.addf %43, %70 : vector<128x32xf32>
    %c0_28 = arith.constant 0 : index
    %c0_29 = arith.constant 0 : index
    %72 = vector.load %arg5[%c0_28, %c0_29] : memref<1x32xf32, #tpu.memory_space<vmem>>, vector<1x32xf32>
    %73 = vector.broadcast %72 : vector<1x32xf32> to vector<128x32xf32>
    %74 = arith.addf %71, %73 : vector<128x32xf32>
    %cst_30 = arith.constant 0.000000e+00 : f32
    %75 = vector.broadcast %cst_30 : f32 to vector<128x32xf32>
    %76 = arith.maximumf %74, %75 : vector<128x32xf32>
    %77 = arith.truncf %76 : vector<128x32xf32> to vector<128x32xbf16>
    %c0_31 = arith.constant 0 : index
    %c0_32 = arith.constant 0 : index
    %78 = vector.load %arg6[%c0_31, %c0_32] : memref<32x8xf32, #tpu.memory_space<vmem>>, vector<32x8xf32>
    %79 = arith.truncf %78 : vector<32x8xf32> to vector<32x8xbf16>
    %cst_33 = arith.constant dense<0.000000e+00> : vector<128x8xf32>
    %80 = tpu.matmul %77, %79, %cst_33 {dimension_numbers = #tpu.dot_dimension_numbers<[1], [0], [0], [1], [0, 0, 1, 1], [], []>} : vector<128x32xbf16>, vector<32x8xbf16>, vector<128x8xf32> -> vector<128x8xf32>
    %c0_34 = arith.constant 0 : index
    %c0_35 = arith.constant 0 : index
    %81 = vector.load %arg7[%c0_34, %c0_35] : memref<1x8xf32, #tpu.memory_space<vmem>>, vector<1x8xf32>
    %cst_36 = arith.constant dense<0.000000e+00> : vector<1x128xf32>
    %82 = tpu.matmul %81, %80, %cst_36 {dimension_numbers = #tpu.dot_dimension_numbers<[1], [1], [0], [0], [0, 0, 1, 0], [], []>} : vector<1x8xf32>, vector<128x8xf32>, vector<1x128xf32> -> vector<1x128xf32>
    %c0_37 = arith.constant 0 : index
    %c0_38 = arith.constant 0 : index
    %83 = vector.load %arg8[%c0_37, %c0_38] : memref<1x8xf32, #tpu.memory_space<vmem>>, vector<1x8xf32>
    %cst_39 = arith.constant dense<0.000000e+00> : vector<128x1xf32>
    %84 = tpu.matmul %80, %83, %cst_39 {dimension_numbers = #tpu.dot_dimension_numbers<[1], [1], [0], [0], [0, 0, 1, 0], [], []>} : vector<128x8xf32>, vector<1x8xf32>, vector<128x1xf32> -> vector<128x1xf32>
    %85 = vector.broadcast %84 : vector<128x1xf32> to vector<128x128xf32>
    %86 = vector.broadcast %82 : vector<1x128xf32> to vector<128x128xf32>
    %87 = arith.addf %85, %86 : vector<128x128xf32>
    %cst_40 = arith.constant 2.000000e-01 : f32
    %88 = vector.broadcast %cst_40 : f32 to vector<128x128xf32>
    %89 = arith.mulf %88, %87 : vector<128x128xf32>
    %90 = arith.maximumf %87, %89 : vector<128x128xf32>
    %91 = arith.addf %90, %5 : vector<128x128xf32>
    %cst_41 = arith.constant dense<0xFF800000> : vector<128xf32>
    %92 = vector.multi_reduction <maximumf>, %91, %cst_41 [1] : vector<128x128xf32> to vector<128xf32>
    %93 = vector.shape_cast %92 : vector<128xf32> to vector<128x1xf32>
    %94 = vector.broadcast %93 : vector<128x1xf32> to vector<128x128xf32>
    %95 = arith.subf %91, %94 : vector<128x128xf32>
    %96 = math.exp %95 : vector<128x128xf32>
    %cst_42 = arith.constant dense<0.000000e+00> : vector<128xf32>
    %97 = vector.multi_reduction <add>, %96, %cst_42 [1] : vector<128x128xf32> to vector<128xf32>
    %98 = vector.shape_cast %97 : vector<128xf32> to vector<128x1xf32>
    %cst_43 = arith.constant 9.99999968E-21 : f32
    %99 = vector.broadcast %cst_43 : f32 to vector<128x1xf32>
    %100 = arith.maximumf %98, %99 : vector<128x1xf32>
    %101 = tpu.reciprocal %100 {approx = true} : vector<128x1xf32> -> vector<128x1xf32>
    %102 = vector.broadcast %101 : vector<128x1xf32> to vector<128x128xf32>
    %103 = arith.mulf %96, %102 : vector<128x128xf32>
    %104 = arith.truncf %103 : vector<128x128xf32> to vector<128x128xbf16>
    %105 = arith.truncf %80 : vector<128x8xf32> to vector<128x8xbf16>
    %cst_44 = arith.constant dense<0.000000e+00> : vector<128x8xf32>
    %106 = tpu.matmul %104, %105, %cst_44 {dimension_numbers = #tpu.dot_dimension_numbers<[1], [0], [0], [1], [0, 0, 1, 1], [], []>} : vector<128x128xbf16>, vector<128x8xbf16>, vector<128x8xf32> -> vector<128x8xf32>
    %c0_45 = arith.constant 0 : index
    %c0_46 = arith.constant 0 : index
    %107 = vector.load %arg9[%c0_45, %c0_46] : memref<1x8xf32, #tpu.memory_space<vmem>>, vector<1x8xf32>
    %108 = vector.broadcast %107 : vector<1x8xf32> to vector<128x8xf32>
    %109 = arith.addf %106, %108 : vector<128x8xf32>
    %cst_47 = arith.constant dense<0xFF800000> : vector<128xf32>
    %110 = vector.multi_reduction <maximumf>, %109, %cst_47 [1] : vector<128x8xf32> to vector<128xf32>
    %111 = vector.shape_cast %110 : vector<128xf32> to vector<128x1xf32>
    %112 = vector.broadcast %111 : vector<128x1xf32> to vector<128x8xf32>
    %113 = arith.subf %109, %112 : vector<128x8xf32>
    %114 = math.exp %113 : vector<128x8xf32>
    %cst_48 = arith.constant dense<0.000000e+00> : vector<128xf32>
    %115 = vector.multi_reduction <add>, %114, %cst_48 [1] : vector<128x8xf32> to vector<128xf32>
    %116 = vector.shape_cast %115 : vector<128xf32> to vector<128x1xf32>
    %117 = math.log %116 : vector<128x1xf32>
    %118 = vector.broadcast %117 : vector<128x1xf32> to vector<128x8xf32>
    %119 = arith.subf %113, %118 : vector<128x8xf32>
    %c0_49 = arith.constant 0 : index
    %c0_50 = arith.constant 0 : index
    %120 = vector.load %arg11[%c0_49, %c0_50] : memref<128x8xf32, #tpu.memory_space<vmem>>, vector<128x8xf32>
    tpu.vector_store %arg11[%c0_49, %c0_50], %119 {strides = array<i32>} : memref<128x8xf32, #tpu.memory_space<vmem>>, vector<128x8xf32>,
    return
  }
}

</mosaic_0001>

<llo_original>
// kernel: gat_forward.1
$region0: #{gat_forward.1}
  #allocation0 [shape = 'u32[]', space=smem, size = 0x4, offset = 0x4, fixed_abs, tag = 'smem constant byte address 0x4 - core index']
  #allocation1 [shape = 'u32[144,128]{1,0:T(1,128)}', space=vmem, size = 0x12000, scoped, tag = 'internal scratch']
  %s0 = inlined_call_operand.vmem [shape: f32[128,16], index: 0, kind: input, shape index: {}]
  %s1 = inlined_call_operand.vmem [shape: f32[16,32], index: 1, kind: input, shape index: {}]
  %s2 = inlined_call_operand.vmem [shape: f32[2,32], index: 2, kind: input, shape index: {}]
  %s3 = inlined_call_operand.vmem [shape: f32[2,32], index: 3, kind: input, shape index: {}]
  %s4 = inlined_call_operand.vmem [shape: f32[2,32], index: 4, kind: input, shape index: {}]
  %s5 = inlined_call_operand.vmem [shape: f32[1,32], index: 5, kind: input, shape index: {}]
  %s6 = inlined_call_operand.vmem [shape: f32[32,8], index: 6, kind: input, shape index: {}]
  %s7 = inlined_call_operand.vmem [shape: f32[1,8], index: 7, kind: input, shape index: {}]
  %s8 = inlined_call_operand.vmem [shape: f32[1,8], index: 8, kind: input, shape index: {}]
  %s9 = inlined_call_operand.vmem [shape: f32[1,8], index: 9, kind: input, shape index: {}]
  %s10 = inlined_call_operand.vmem [shape: f32[128,128], index: 10, kind: input, shape index: {}]
  %s11 = inlined_call_operand.vmem [shape: f32[128,8], index: 11, kind: output, shape index: {}]
  %s12 = sld [smem:[#allocation0]]
  $region54: #{gat_forward.1} parent=0
    _
  %s14 = ssub.s32 1, %s12
  %s15 = scalar_select 0, %s14, %s12
  // Predicated region
  $region2: #{gat_forward.1} parent=0 // pred_check
    _
  $region3: #{gat_forward.1} parent=0 // pred_check_branch
    %17 = sbr.rel (0) target = $region5
  $region4: #{gat_forward.1} parent=0 // pred_region
    _
  $region5: #{gat_forward.1} parent=0 // pred_fallthru
    _
  // Predicated region
  $region6: #{gat_forward.1} parent=0 // pred_check
    _
  $region7: #{gat_forward.1} parent=0 // pred_check_branch
    %19 = sbr.rel (0) target = $region9
  $region8: #{gat_forward.1} parent=0 // pred_region
    _
  $region9: #{gat_forward.1} parent=0 // pred_fallthru
    _
  // Predicated region
  $region10: #{gat_forward.1} parent=0 // pred_check
    _
  $region11: #{gat_forward.1} parent=0 // pred_check_branch
    %21 = sbr.rel (0) target = $region13
  $region12: #{gat_forward.1} parent=0 // pred_region
    _
  $region13: #{gat_forward.1} parent=0 // pred_fallthru
    _
  // Predicated region
  $region14: #{gat_forward.1} parent=0 // pred_check
    _
  $region15: #{gat_forward.1} parent=0 // pred_check_branch
    %23 = sbr.rel (0) target = $region17
  $region16: #{gat_forward.1} parent=0 // pred_region
    _
  $region17: #{gat_forward.1} parent=0 // pred_fallthru
    _
  // Predicated region
  $region18: #{gat_forward.1} parent=0 // pred_check
    _
  $region19: #{gat_forward.1} parent=0 // pred_check_branch
    %25 = sbr.rel (0) target = $region21
  $region20: #{gat_forward.1} parent=0 // pred_region
    _
  $region21: #{gat_forward.1} parent=0 // pred_fallthru
    _
  // Predicated region
  $region22: #{gat_forward.1} parent=0 // pred_check
    _
  $region23: #{gat_forward.1} parent=0 // pred_check_branch
    %27 = sbr.rel (0) target = $region25
  $region24: #{gat_forward.1} parent=0 // pred_region
    _
  $region25: #{gat_forward.1} parent=0 // pred_fallthru
    _
  // Predicated region
  $region26: #{gat_forward.1} parent=0 // pred_check
    _
  $region27: #{gat_forward.1} parent=0 // pred_check_branch
    %29 = sbr.rel (0) target = $region29
  $region28: #{gat_forward.1} parent=0 // pred_region
    _
  $region29: #{gat_forward.1} parent=0 // pred_fallthru
    _
  // Predicated region
  $region30: #{gat_forward.1} parent=0 // pred_check
    _
  $region31: #{gat_forward.1} parent=0 // pred_check_branch
    %31 = sbr.rel (0) target = $region33
  $region32: #{gat_forward.1} parent=0 // pred_region
    _
  $region33: #{gat_forward.1} parent=0 // pred_fallthru
    _
  // Predicated region
  $region34: #{gat_forward.1} parent=0 // pred_check
    _
  $region35: #{gat_forward.1} parent=0 // pred_check_branch
    %33 = sbr.rel (0) target = $region37
  $region36: #{gat_forward.1} parent=0 // pred_region
    _
  $region37: #{gat_forward.1} parent=0 // pred_fallthru
    _
  // Predicated region
  $region38: #{gat_forward.1} parent=0 // pred_check
    _
  $region39: #{gat_forward.1} parent=0 // pred_check_branch
    %35 = sbr.rel (0) target = $region41
  $region40: #{gat_forward.1} parent=0 // pred_region
    _
  $region41: #{gat_forward.1} parent=0 // pred_fallthru
    _
  // Predicated region
  $region42: #{gat_forward.1} parent=0 // pred_check
    _
  $region43: #{gat_forward.1} parent=0 // pred_check_branch
    %37 = sbr.rel (0) target = $region45
  $region44: #{gat_forward.1} parent=0 // pred_region
    _
  $region45: #{gat_forward.1} parent=0 // pred_fallthru
    _
  %v39 = vld [vmem:[%s10] sm:$0xff]
  %v40 = vld [vmem:[%s10 + $0x8] sm:$0xff]
  %v41 = vld [vmem:[%s10 + $0x10] sm:$0xff]
  %v42 = vld [vmem:[%s10 + $0x18] sm:$0xff]
  %v43 = vld [vmem:[%s10 + $0x20] sm:$0xff]
  %v44 = vld [vmem:[%s10 + $0x28] sm:$0xff]
  %v45 = vld [vmem:[%s10 + $0x30] sm:$0xff]
  %v46 = vld [vmem:[%s10 + $0x38] sm:$0xff]
  %v47 = vld [vmem:[%s10 + $0x40] sm:$0xff]
  %v48 = vld [vmem:[%s10 + $0x48] sm:$0xff]
  %v49 = vld [vmem:[%s10 + $0x50] sm:$0xff]
  %v50 = vld [vmem:[%s10 + $0x58] sm:$0xff]
  %v51 = vld [vmem:[%s10 + $0x60] sm:$0xff]
  %v52 = vld [vmem:[%s10 + $0x68] sm:$0xff]
  %v53 = vld [vmem:[%s10 + $0x70] sm:$0xff]
  %v54 = vld [vmem:[%s10 + $0x78] sm:$0xff]
  %vm55 = vcmp.gt.f32.partialorder %v39, 0.0
  %vm56 = vcmp.gt.f32.partialorder %v40, 0.0
  %vm57 = vcmp.gt.f32.partialorder %v41, 0.0
  %vm58 = vcmp.gt.f32.partialorder %v42, 0.0
  %vm59 = vcmp.gt.f32.partialorder %v43, 0.0
  %vm60 = vcmp.gt.f32.partialorder %v44, 0.0
  %vm61 = vcmp.gt.f32.partialorder %v45, 0.0
  %vm62 = vcmp.gt.f32.partialorder %v46, 0.0
  %vm63 = vcmp.gt.f32.partialorder %v47, 0.0
  %vm64 = vcmp.gt.f32.partialorder %v48, 0.0
  %vm65 = vcmp.gt.f32.partialorder %v49, 0.0
  %vm66 = vcmp.gt.f32.partialorder %v50, 0.0
  %vm67 = vcmp.gt.f32.partialorder %v51, 0.0
  %vm68 = vcmp.gt.f32.partialorder %v52, 0.0
  %vm69 = vcmp.gt.f32.partialorder %v53, 0.0
  %vm70 = vcmp.gt.f32.partialorder %v54, 0.0
  %v71 = vsel %vm55, 0.0, -1e+30
  %v72 = vsel %vm56, 0.0, -1e+30
  %v73 = vsel %vm57, 0.0, -1e+30
  %v74 = vsel %vm58, 0.0, -1e+30
  %v75 = vsel %vm59, 0.0, -1e+30
  %v76 = vsel %vm60, 0.0, -1e+30
  %v77 = vsel %vm61, 0.0, -1e+30
  %v78 = vsel %vm62, 0.0, -1e+30
  %v79 = vsel %vm63, 0.0, -1e+30
  %v80 = vsel %vm64, 0.0, -1e+30
  %v81 = vsel %vm65, 0.0, -1e+30
  %v82 = vsel %vm66, 0.0, -1e+30
  %v83 = vsel %vm67, 0.0, -1e+30
  %v84 = vsel %vm68, 0.0, -1e+30
  %v85 = vsel %vm69, 0.0, -1e+30
  %v86 = vsel %vm70, 0.0, -1e+30
  %v87 = vld [vmem:[%s0] sm:$0xff]
  %v88 = vld [vmem:[%s0 + $0x8] sm:$0xff]
  %v89 = vld [vmem:[%s0 + $0x10] sm:$0xff]
  %v90 = vld [vmem:[%s0 + $0x18] sm:$0xff]
  %v91 = vld [vmem:[%s0 + $0x20] sm:$0xff]
  %v92 = vld [vmem:[%s0 + $0x28] sm:$0xff]
  %v93 = vld [vmem:[%s0 + $0x30] sm:$0xff]
  %v94 = vld [vmem:[%s0 + $0x38] sm:$0xff]
  %v95 = vld [vmem:[%s0 + $0x40] sm:$0xff]
  %v96 = vld [vmem:[%s0 + $0x48] sm:$0xff]
  %v97 = vld [vmem:[%s0 + $0x50] sm:$0xff]
  %v98 = vld [vmem:[%s0 + $0x58] sm:$0xff]
  %v99 = vld [vmem:[%s0 + $0x60] sm:$0xff]
  %v100 = vld [vmem:[%s0 + $0x68] sm:$0xff]
  %v101 = vld [vmem:[%s0 + $0x70] sm:$0xff]
  %v102 = vld [vmem:[%s0 + $0x78] sm:$0xff]
  %v103 = vpack.c.bf16 %v88, %v87
  %v104 = vpack.c.bf16 %v90, %v89
  %v105 = vpack.c.bf16 %v92, %v91
  %v106 = vpack.c.bf16 %v94, %v93
  %v107 = vpack.c.bf16 %v96, %v95
  %v108 = vpack.c.bf16 %v98, %v97
  %v109 = vpack.c.bf16 %v100, %v99
  %v110 = vpack.c.bf16 %v102, %v101
  %v111 = vld [vmem:[%s1] sm:$0xff]
  %v112 = vld [vmem:[%s1 + $0x8] sm:$0xff]
  %v113 = vpack.c.bf16 %v112, %v111
  %vm114 = vcmask 130048
  %v116 = vsel %vm114, %v103, 0
  %v119 = vsel %vm114, %v104, 0
  %v122 = vsel %vm114, %v105, 0
  %v125 = vsel %vm114, %v106, 0
  %v128 = vsel %vm114, %v107, 0
  %v131 = vsel %vm114, %v108, 0
  %v134 = vsel %vm114, %v109, 0
  %v137 = vsel %vm114, %v110, 0
  %139 = vmatprep.subr.bf16.mxu0 0
  %140 = vmatpush1.bf16.msra.mxu0 0
  %141 = vmatprep.subr.bf16.mxu0 0
  %142 = vmatpush1.bf16.msra.mxu0 0
  %143 = vmatprep.subr.bf16.mxu0 0
  %144 = vmatpush1.bf16.msra.mxu0 0
  %145 = vmatprep.subr.bf16.mxu0 0
  %146 = vmatpush1.bf16.msra.mxu0 0
  %147 = vmatprep.subr.bf16.mxu0 0
  %148 = vmatpush1.bf16.msra.mxu0 0
  %149 = vmatprep.subr.bf16.mxu0 0
  %150 = vmatpush1.bf16.msra.mxu0 0
  %151 = vmatprep.subr.bf16.mxu0 0
  %152 = vmatpush1.bf16.msra.mxu0 0
  %153 = vmatprep.subr.bf16.mxu0 0
  %154 = vmatpush1.bf16.msra.mxu0 %v113
  %155 = vmatprep.subr.bf16.mxu0 0
  %156 = vmatpush2.bf16.msra.mxu0 0
  %157 = vmatprep.subr.bf16.mxu0 0
  %158 = vmatpush2.bf16.msra.mxu0 0
  %159 = vmatprep.subr.bf16.mxu0 0
  %160 = vmatpush2.bf16.msra.mxu0 0
  %161 = vmatprep.subr.bf16.mxu0 0
  %162 = vmatpush2.bf16.msra.mxu0 0
  %163 = vmatprep.subr.bf16.mxu0 0
  %164 = vmatpush2.bf16.msra.mxu0 0
  %165 = vmatprep.subr.bf16.mxu0 0
  %166 = vmatpush2.bf16.msra.mxu0 0
  %167 = vmatprep.subr.bf16.mxu0 0
  %168 = vmatpush2.bf16.msra.mxu0 0
  %169 = vmatprep.subr.bf16.mxu0 0
  %170 = vmatpush2.bf16.msra.mxu0 0
  %171 = vmatprep.mubr.bf16.mxu0 0
  %172 = vmatmul.mubr.bf16.gmra.mxu0 %v116
  %v173 = vpop.f32.mrf.mxu0
  %v174 = vadd.f32 0.0, %v173
  %v175 = vpop.f32.mrf.mxu0
  %v176 = vpop.f32.mrf.mxu0
  %v177 = vadd.f32 0.0, %v176
  %v178 = vpop.f32.mrf.mxu0
  %179 = vmatprep.mubr.bf16.mxu0 0
  %180 = vmatmul.mubr.bf16.gmra.mxu0 %v119
  %v181 = vpop.f32.mrf.mxu0
  %v182 = vadd.f32 0.0, %v181
  %v183 = vpop.f32.mrf.mxu0
  %v184 = vpop.f32.mrf.mxu0
  %v185 = vadd.f32 0.0, %v184
  %v186 = vpop.f32.mrf.mxu0
  %187 = vmatprep.mubr.bf16.mxu0 0
  %188 = vmatmul.mubr.bf16.gmra.mxu0 %v122
  %v189 = vpop.f32.mrf.mxu0
  %v190 = vadd.f32 0.0, %v189
  %v191 = vpop.f32.mrf.mxu0
  %v192 = vpop.f32.mrf.mxu0
  %v193 = vadd.f32 0.0, %v192
  %v194 = vpop.f32.mrf.mxu0
  %195 = vmatprep.mubr.bf16.mxu0 0
  %196 = vmatmul.mubr.bf16.gmra.mxu0 %v125
  %v197 = vpop.f32.mrf.mxu0
  %v198 = vadd.f32 0.0, %v197
  %v199 = vpop.f32.mrf.mxu0
  %v200 = vpop.f32.mrf.mxu0
  %v201 = vadd.f32 0.0, %v200
  %v202 = vpop.f32.mrf.mxu0
  %203 = vmatprep.mubr.bf16.mxu0 0
  %204 = vmatmul.mubr.bf16.gmra.mxu0 %v128
  %v205 = vpop.f32.mrf.mxu0
  %v206 = vadd.f32 0.0, %v205
  %v207 = vpop.f32.mrf.mxu0
  %v208 = vpop.f32.mrf.mxu0
  %v209 = vadd.f32 0.0, %v208
  %v210 = vpop.f32.mrf.mxu0
  %211 = vmatprep.mubr.bf16.mxu0 0
  %212 = vmatmul.mubr.bf16.gmra.mxu0 %v131
  %v213 = vpop.f32.mrf.mxu0
  %v214 = vadd.f32 0.0, %v213
  %v215 = vpop.f32.mrf.mxu0
  %v216 = vpop.f32.mrf.mxu0
  %v217 = vadd.f32 0.0, %v216
  %v218 = vpop.f32.mrf.mxu0
  %219 = vmatprep.mubr.bf16.mxu0 0
  %220 = vmatmul.mubr.bf16.gmra.mxu0 %v134
  %v221 = vpop.f32.mrf.mxu0
  %v222 = vadd.f32 0.0, %v221
  %v223 = vpop.f32.mrf.mxu0
  %v224 = vpop.f32.mrf.mxu0
  %v225 = vadd.f32 0.0, %v224
  %v226 = vpop.f32.mrf.mxu0
  %227 = vmatprep.mubr.bf16.mxu0 0
  %228 = vmatmul.mubr.bf16.gmra.mxu0 %v137
  %v229 = vpop.f32.mrf.mxu0
  %v230 = vadd.f32 0.0, %v229
  %v231 = vpop.f32.mrf.mxu0
  %v232 = vpop.f32.mrf.mxu0
  %v233 = vadd.f32 0.0, %v232
  %v234 = vpop.f32.mrf.mxu0
  %235 = vdwg.mxu0
  %v236 = vld [vmem:[%s2] sm:$0x3]
  %vm237 = vcmask 261120
  %v239 = vsel %vm237, %v236, 0
  %v242 = vsel %vm237, %v174, 0
  %v245 = vsel %vm237, %v177, 0
  %v248 = vsel %vm237, %v182, 0
  %v251 = vsel %vm237, %v185, 0
  %v254 = vsel %vm237, %v190, 0
  %v257 = vsel %vm237, %v193, 0
  %v260 = vsel %vm237, %v198, 0
  %v263 = vsel %vm237, %v201, 0
  %v266 = vsel %vm237, %v206, 0
  %v269 = vsel %vm237, %v209, 0
  %v272 = vsel %vm237, %v214, 0
  %v275 = vsel %vm237, %v217, 0
  %v278 = vsel %vm237, %v222, 0
  %v281 = vsel %vm237, %v225, 0
  %v284 = vsel %vm237, %v230, 0
  %v287 = vsel %vm237, %v233, 0
  %289 = vmatprep.subr.mxu0 0.0
  %290 = vmatpush1.xpose.msra.mxu0 %v287
  %291 = vmatprep.subr.mxu0 0.0
  %292 = vmatpush1.xpose.msra.mxu0 %v284
  %293 = vmatprep.subr.mxu0 0.0
  %294 = vmatpush1.xpose.msra.mxu0 %v281
  %295 = vmatprep.subr.mxu0 0.0
  %296 = vmatpush1.xpose.msra.mxu0 %v278
  %297 = vmatprep.subr.mxu0 0.0
  %298 = vmatpush1.xpose.msra.mxu0 %v275
  %299 = vmatprep.subr.mxu0 0.0
  %300 = vmatpush1.xpose.msra.mxu0 %v272
  %301 = vmatprep.subr.mxu0 0.0
  %302 = vmatpush1.xpose.msra.mxu0 %v269
  %303 = vmatprep.subr.mxu0 0.0
  %304 = vmatpush1.xpose.msra.mxu0 %v266
  %305 = vmatprep.subr.mxu0 0.0
  %306 = vmatpush1.xpose.msra.mxu0 %v263
  %307 = vmatprep.subr.mxu0 0.0
  %308 = vmatpush1.xpose.msra.mxu0 %v260
  %309 = vmatprep.subr.mxu0 0.0
  %310 = vmatpush1.xpose.msra.mxu0 %v257
  %311 = vmatprep.subr.mxu0 0.0
  %312 = vmatpush1.xpose.msra.mxu0 %v254
  %313 = vmatprep.subr.mxu0 0.0
  %314 = vmatpush1.xpose.msra.mxu0 %v251
  %315 = vmatprep.subr.mxu0 0.0
  %316 = vmatpush1.xpose.msra.mxu0 %v248
  %317 = vmatprep.subr.mxu0 0.0
  %318 = vmatpush1.xpose.msra.mxu0 %v245
  %319 = vmatprep.subr.mxu0 0.0
  %320 = vmatpush1.xpose.msra.mxu0 %v242
  %321 = vmatprep.subr.mxu0 0.0
  %322 = vmatpush2.xpose.msra.mxu0 0.0
  %323 = vmatprep.subr.mxu0 0.0
  %324 = vmatpush2.xpose.msra.mxu0 0.0
  %325 = vmatprep.subr.mxu0 0.0
  %326 = vmatpush2.xpose.msra.mxu0 0.0
  %327 = vmatprep.subr.mxu0 0.0
  %328 = vmatpush2.xpose.msra.mxu0 0.0
  %329 = vmatprep.subr.mxu0 0.0
  %330 = vmatpush2.xpose.msra.mxu0 0.0
  %331 = vmatprep.subr.mxu0 0.0
  %332 = vmatpush2.xpose.msra.mxu0 0.0
  %333 = vmatprep.subr.mxu0 0.0
  %334 = vmatpush2.xpose.msra.mxu0 0.0
  %335 = vmatprep.subr.mxu0 0.0
  %336 = vmatpush2.xpose.msra.mxu0 0.0
  %337 = vmatprep.subr.mxu0 0.0
  %338 = vmatpush2.xpose.msra.mxu0 0.0
  %339 = vmatprep.subr.mxu0 0.0
  %340 = vmatpush2.xpose.msra.mxu0 0.0
  %341 = vmatprep.subr.mxu0 0.0
  %342 = vmatpush2.xpose.msra.mxu0 0.0
  %343 = vmatprep.subr.mxu0 0.0
  %344 = vmatpush2.xpose.msra.mxu0 0.0
  %345 = vmatprep.subr.mxu0 0.0
  %346 = vmatpush2.xpose.msra.mxu0 0.0
  %347 = vmatprep.subr.mxu0 0.0
  %348 = vmatpush2.xpose.msra.mxu0 0.0
  %349 = vmatprep.subr.mxu0 0.0
  %350 = vmatpush2.xpose.msra.mxu0 0.0
  %351 = vmatprep.subr.mxu0 0.0
  %352 = vmatpush2.xpose.msra.mxu0 0.0
  %353 = vmatprep.mubr.f32.mxu0 0.0
  %354 = vmatmul.mubr.f32.gmra.mxu0 %v239
  %v355 = vpop.f32.mrf.mxu0
  %v356 = vadd.f32 0.0, %v355
  %v357 = vpop.f32.mrf.mxu0
  %358 = vdwg.mxu0
  %v359 = vld [vmem:[%s3] sm:$0x3]
  %v361 = vsel %vm237, %v359, 0
  %363 = vmatprep.subr.mxu0 0.0
  %364 = vmatpush1.xpose.msra.mxu0 0.0
  %365 = vmatprep.subr.mxu0 0.0
  %366 = vmatpush1.xpose.msra.mxu0 0.0
  %367 = vmatprep.subr.mxu0 0.0
  %368 = vmatpush1.xpose.msra.mxu0 0.0
  %369 = vmatprep.subr.mxu0 0.0
  %370 = vmatpush1.xpose.msra.mxu0 0.0
  %371 = vmatprep.subr.mxu0 0.0
  %372 = vmatpush1.xpose.msra.mxu0 0.0
  %373 = vmatprep.subr.mxu0 0.0
  %374 = vmatpush1.xpose.msra.mxu0 0.0
  %375 = vmatprep.subr.mxu0 0.0
  %376 = vmatpush1.xpose.msra.mxu0 0.0
  %377 = vmatprep.subr.mxu0 0.0
  %378 = vmatpush1.xpose.msra.mxu0 0.0
  %379 = vmatprep.subr.mxu0 0.0
  %380 = vmatpush1.xpose.msra.mxu0 0.0
  %381 = vmatprep.subr.mxu0 0.0
  %382 = vmatpush1.xpose.msra.mxu0 0.0
  %383 = vmatprep.subr.mxu0 0.0
  %384 = vmatpush1.xpose.msra.mxu0 0.0
  %385 = vmatprep.subr.mxu0 0.0
  %386 = vmatpush1.xpose.msra.mxu0 0.0
  %387 = vmatprep.subr.mxu0 0.0
  %388 = vmatpush1.xpose.msra.mxu0 0.0
  %389 = vmatprep.subr.mxu0 0.0
  %390 = vmatpush1.xpose.msra.mxu0 0.0
  %391 = vmatprep.subr.mxu0 0.0
  %392 = vmatpush1.xpose.msra.mxu0 0.0
  %393 = vmatprep.subr.mxu0 0.0
  %394 = vmatpush1.xpose.msra.mxu0 %v361
  %395 = vmatprep.subr.mxu0 0.0
  %396 = vmatpush2.xpose.msra.mxu0 0.0
  %397 = vmatprep.subr.mxu0 0.0
  %398 = vmatpush2.xpose.msra.mxu0 0.0
  %399 = vmatprep.subr.mxu0 0.0
  %400 = vmatpush2.xpose.msra.mxu0 0.0
  %401 = vmatprep.subr.mxu0 0.0
  %402 = vmatpush2.xpose.msra.mxu0 0.0
  %403 = vmatprep.subr.mxu0 0.0
  %404 = vmatpush2.xpose.msra.mxu0 0.0
  %405 = vmatprep.subr.mxu0 0.0
  %406 = vmatpush2.xpose.msra.mxu0 0.0
  %407 = vmatprep.subr.mxu0 0.0
  %408 = vmatpush2.xpose.msra.mxu0 0.0
  %409 = vmatprep.subr.mxu0 0.0
  %410 = vmatpush2.xpose.msra.mxu0 0.0
  %411 = vmatprep.subr.mxu0 0.0
  %412 = vmatpush2.xpose.msra.mxu0 0.0
  %413 = vmatprep.subr.mxu0 0.0
  %414 = vmatpush2.xpose.msra.mxu0 0.0
  %415 = vmatprep.subr.mxu0 0.0
  %416 = vmatpush2.xpose.msra.mxu0 0.0
  %417 = vmatprep.subr.mxu0 0.0
  %418 = vmatpush2.xpose.msra.mxu0 0.0
  %419 = vmatprep.subr.mxu0 0.0
  %420 = vmatpush2.xpose.msra.mxu0 0.0
  %421 = vmatprep.subr.mxu0 0.0
  %422 = vmatpush2.xpose.msra.mxu0 0.0
  %423 = vmatprep.subr.mxu0 0.0
  %424 = vmatpush2.xpose.msra.mxu0 0.0
  %425 = vmatprep.subr.mxu0 0.0
  %426 = vmatpush2.xpose.msra.mxu0 0.0
  %427 = vmatprep.mubr.f32.mxu0 0.0
  %428 = vmatmul.mubr.f32.gmra.mxu0 %v242
  %v429 = vpop.f32.mrf.mxu0
  %v430 = vadd.f32 0.0, %v429
  %v431 = vpop.f32.mrf.mxu0
  %432 = vmatprep.mubr.f32.mxu0 0.0
  %433 = vmatmul.mubr.f32.gmra.mxu0 %v245
  %v434 = vpop.f32.mrf.mxu0
  %v435 = vadd.f32 0.0, %v434
  %v436 = vpop.f32.mrf.mxu0
  %437 = vmatprep.mubr.f32.mxu0 0.0
  %438 = vmatmul.mubr.f32.gmra.mxu0 %v248
  %v439 = vpop.f32.mrf.mxu0
  %v440 = vadd.f32 0.0, %v439
  %v441 = vpop.f32.mrf.mxu0
  %442 = vmatprep.mubr.f32.mxu0 0.0
  %443 = vmatmul.mubr.f32.gmra.mxu0 %v251
  %v444 = vpop.f32.mrf.mxu0
  %v445 = vadd.f32 0.0, %v444
  %v446 = vpop.f32.mrf.mxu0
  %447 = vmatprep.mubr.f32.mxu0 0.0
  %448 = vmatmul.mubr.f32.gmra.mxu0 %v254
  %v449 = vpop.f32.mrf.mxu0
  %v450 = vadd.f32 0.0, %v449
  %v451 = vpop.f32.mrf.mxu0
  %452 = vmatprep.mubr.f32.mxu0 0.0
  %453 = vmatmul.mubr.f32.gmra.mxu0 %v257
  %v454 = vpop.f32.mrf.mxu0
  %v455 = vadd.f32 0.0, %v454
  %v456 = vpop.f32.mrf.mxu0
  %457 = vmatprep.mubr.f32.mxu0 0.0
  %458 = vmatmul.mubr.f32.gmra.mxu0 %v260
  %v459 = vpop.f32.mrf.mxu0
  %v460 = vadd.f32 0.0, %v459
  %v461 = vpop.f32.mrf.mxu0
  %462 = vmatprep.mubr.f32.mxu0 0.0
  %463 = vmatmul.mubr.f32.gmra.mxu0 %v263
  %v464 = vpop.f32.mrf.mxu0
  %v465 = vadd.f32 0.0, %v464
  %v466 = vpop.f32.mrf.mxu0
  %467 = vmatprep.mubr.f32.mxu0 0.0
  %468 = vmatmul.mubr.f32.gmra.mxu0 %v266
  %v469 = vpop.f32.mrf.mxu0
  %v470 = vadd.f32 0.0, %v469
  %v471 = vpop.f32.mrf.mxu0
  %472 = vmatprep.mubr.f32.mxu0 0.0
  %473 = vmatmul.mubr.f32.gmra.mxu0 %v269
  %v474 = vpop.f32.mrf.mxu0
  %v475 = vadd.f32 0.0, %v474
  %v476 = vpop.f32.mrf.mxu0
  %477 = vmatprep.mubr.f32.mxu0 0.0
  %478 = vmatmul.mubr.f32.gmra.mxu0 %v272
  %v479 = vpop.f32.mrf.mxu0
  %v480 = vadd.f32 0.0, %v479
  %v481 = vpop.f32.mrf.mxu0
  %482 = vmatprep.mubr.f32.mxu0 0.0
  %483 = vmatmul.mubr.f32.gmra.mxu0 %v275
  %v484 = vpop.f32.mrf.mxu0
  %v485 = vadd.f32 0.0, %v484
  %v486 = vpop.f32.mrf.mxu0
  %487 = vmatprep.mubr.f32.mxu0 0.0
  %488 = vmatmul.mubr.f32.gmra.mxu0 %v278
  %v489 = vpop.f32.mrf.mxu0
  %v490 = vadd.f32 0.0, %v489
  %v491 = vpop.f32.mrf.mxu0
  %492 = vmatprep.mubr.f32.mxu0 0.0
  %493 = vmatmul.mubr.f32.gmra.mxu0 %v281
  %v494 = vpop.f32.mrf.mxu0
  %v495 = vadd.f32 0.0, %v494
  %v496 = vpop.f32.mrf.mxu0
  %497 = vmatprep.mubr.f32.mxu0 0.0
  %498 = vmatmul.mubr.f32.gmra.mxu0 %v284
  %v499 = vpop.f32.mrf.mxu0
  %v500 = vadd.f32 0.0, %v499
  %v501 = vpop.f32.mrf.mxu0
  %502 = vmatprep.mubr.f32.mxu0 0.0
  %503 = vmatmul.mubr.f32.gmra.mxu0 %v287
  %v504 = vpop.f32.mrf.mxu0
  %v505 = vadd.f32 0.0, %v504
  %v506 = vpop.f32.mrf.mxu0
  %507 = vdwg.mxu0
  %509 = vset.pattern.permute.xlu0 0
  %510 = vperm.xlu0 %509, %v430
  %v511 = vpop.permute.xlu0 %510
  %514 = vset.pattern.permute.xlu0 0
  %515 = vperm.xlu0 %514, %v435
  %v516 = vpop.permute.xlu0 %515
  %519 = vset.pattern.permute.xlu0 0
  %520 = vperm.xlu0 %519, %v440
  %v521 = vpop.permute.xlu0 %520
  %524 = vset.pattern.permute.xlu0 0
  %525 = vperm.xlu0 %524, %v445
  %v526 = vpop.permute.xlu0 %525
  %529 = vset.pattern.permute.xlu0 0
  %530 = vperm.xlu0 %529, %v450
  %v531 = vpop.permute.xlu0 %530
  %534 = vset.pattern.permute.xlu0 0
  %535 = vperm.xlu0 %534, %v455
  %v536 = vpop.permute.xlu0 %535
  %539 = vset.pattern.permute.xlu0 0
  %540 = vperm.xlu0 %539, %v460
  %v541 = vpop.permute.xlu0 %540
  %544 = vset.pattern.permute.xlu0 0
  %545 = vperm.xlu0 %544, %v465
  %v546 = vpop.permute.xlu0 %545
  %549 = vset.pattern.permute.xlu0 0
  %550 = vperm.xlu0 %549, %v470
  %v551 = vpop.permute.xlu0 %550
  %554 = vset.pattern.permute.xlu0 0
  %555 = vperm.xlu0 %554, %v475
  %v556 = vpop.permute.xlu0 %555
  %559 = vset.pattern.permute.xlu0 0
  %560 = vperm.xlu0 %559, %v480
  %v561 = vpop.permute.xlu0 %560
  %564 = vset.pattern.permute.xlu0 0
  %565 = vperm.xlu0 %564, %v485
  %v566 = vpop.permute.xlu0 %565
  %569 = vset.pattern.permute.xlu0 0
  %570 = vperm.xlu0 %569, %v490
  %v571 = vpop.permute.xlu0 %570
  %574 = vset.pattern.permute.xlu0 0
  %575 = vperm.xlu0 %574, %v495
  %v576 = vpop.permute.xlu0 %575
  %579 = vset.pattern.permute.xlu0 0
  %580 = vperm.xlu0 %579, %v500
  %v581 = vpop.permute.xlu0 %580
  %584 = vset.pattern.permute.xlu0 0
  %585 = vperm.xlu0 %584, %v505
  %v586 = vpop.permute.xlu0 %585
  %v588 = vlaneseq
  %v589 = vshrl.u32 %v588, 7
  %v590 = vsub.s32 0, %v589
  %v591 = vrot.slane %v356, %v590
  %v592 = vadd.f32 %v511, %v591
  %v593 = vadd.f32 %v516, %v591
  %v594 = vadd.f32 %v521, %v591
  %v595 = vadd.f32 %v526, %v591
  %v596 = vadd.f32 %v531, %v591
  %v597 = vadd.f32 %v536, %v591
  %v598 = vadd.f32 %v541, %v591
  %v599 = vadd.f32 %v546, %v591
  %v600 = vadd.f32 %v551, %v591
  %v601 = vadd.f32 %v556, %v591
  %v602 = vadd.f32 %v561, %v591
  %v603 = vadd.f32 %v566, %v591
  %v604 = vadd.f32 %v571, %v591
  %v605 = vadd.f32 %v576, %v591
  %v606 = vadd.f32 %v581, %v591
  %v607 = vadd.f32 %v586, %v591
  %v608 = vmul.f32 %v592, 0.2
  %v609 = vmul.f32 %v593, 0.2
  %v610 = vmul.f32 %v594, 0.2
  %v611 = vmul.f32 %v595, 0.2
  %v612 = vmul.f32 %v596, 0.2
  %v613 = vmul.f32 %v597, 0.2
  %v614 = vmul.f32 %v598, 0.2
  %v615 = vmul.f32 %v599, 0.2
  %v616 = vmul.f32 %v600, 0.2
  %v617 = vmul.f32 %v601, 0.2
  %v618 = vmul.f32 %v602, 0.2
  %v619 = vmul.f32 %v603, 0.2
  %v620 = vmul.f32 %v604, 0.2
  %v621 = vmul.f32 %v605, 0.2
  %v622 = vmul.f32 %v606, 0.2
  %v623 = vmul.f32 %v607, 0.2
  %v624 = vmax.f32 %v592, %v608
  %v625 = vmax.f32 %v593, %v609
  %v626 = vmax.f32 %v594, %v610
  %v627 = vmax.f32 %v595, %v611
  %v628 = vmax.f32 %v596, %v612
  %v629 = vmax.f32 %v597, %v613
  %v630 = vmax.f32 %v598, %v614
  %v631 = vmax.f32 %v599, %v615
  %v632 = vmax.f32 %v600, %v616
  %v633 = vmax.f32 %v601, %v617
  %v634 = vmax.f32 %v602, %v618
  %v635 = vmax.f32 %v603, %v619
  %v636 = vmax.f32 %v604, %v620
  %v637 = vmax.f32 %v605, %v621
  %v638 = vmax.f32 %v606, %v622
  %v639 = vmax.f32 %v607, %v623
  %v640 = vadd.f32 %v624, %v71
  %v641 = vadd.f32 %v625, %v72
  %v642 = vadd.f32 %v626, %v73
  %v643 = vadd.f32 %v627, %v74
  %v644 = vadd.f32 %v628, %v75
  %v645 = vadd.f32 %v629, %v76
  %v646 = vadd.f32 %v630, %v77
  %v647 = vadd.f32 %v631, %v78
  %v648 = vadd.f32 %v632, %v79
  %v649 = vadd.f32 %v633, %v80
  %v650 = vadd.f32 %v634, %v81
  %v651 = vadd.f32 %v635, %v82
  %v652 = vadd.f32 %v636, %v83
  %v653 = vadd.f32 %v637, %v84
  %v654 = vadd.f32 %v638, %v85
  %v655 = vadd.f32 %v639, %v86
  %656 = vmax.xlane.f32.xlu0 %v640
  %v657 = vpop.xlane.xlu0 %656
  %658 = vmax.xlane.f32.xlu0 %v641
  %v659 = vpop.xlane.xlu0 %658
  %660 = vmax.xlane.f32.xlu0 %v642
  %v661 = vpop.xlane.xlu0 %660
  %662 = vmax.xlane.f32.xlu0 %v643
  %v663 = vpop.xlane.xlu0 %662
  %664 = vmax.xlane.f32.xlu0 %v644
  %v665 = vpop.xlane.xlu0 %664
  %666 = vmax.xlane.f32.xlu0 %v645
  %v667 = vpop.xlane.xlu0 %666
  %668 = vmax.xlane.f32.xlu0 %v646
  %v669 = vpop.xlane.xlu0 %668
  %670 = vmax.xlane.f32.xlu0 %v647
  %v671 = vpop.xlane.xlu0 %670
  %672 = vmax.xlane.f32.xlu0 %v648
  %v673 = vpop.xlane.xlu0 %672
  %674 = vmax.xlane.f32.xlu0 %v649
  %v675 = vpop.xlane.xlu0 %674
  %676 = vmax.xlane.f32.xlu0 %v650
  %v677 = vpop.xlane.xlu0 %676
  %678 = vmax.xlane.f32.xlu0 %v651
  %v679 = vpop.xlane.xlu0 %678
  %680 = vmax.xlane.f32.xlu0 %v652
  %v681 = vpop.xlane.xlu0 %680
  %682 = vmax.xlane.f32.xlu0 %v653
  %v683 = vpop.xlane.xlu0 %682
  %684 = vmax.xlane.f32.xlu0 %v654
  %v685 = vpop.xlane.xlu0 %684
  %686 = vmax.xlane.f32.xlu0 %v655
  %v687 = vpop.xlane.xlu0 %686
  %v688 = vsub.f32 %v640, %v657
  %v689 = vsub.f32 %v641, %v659
  %v690 = vsub.f32 %v642, %v661
  %v691 = vsub.f32 %v643, %v663
  %v692 = vsub.f32 %v644, %v665
  %v693 = vsub.f32 %v645, %v667
  %v694 = vsub.f32 %v646, %v669
  %v695 = vsub.f32 %v647, %v671
  %v696 = vsub.f32 %v648, %v673
  %v697 = vsub.f32 %v649, %v675
  %v698 = vsub.f32 %v650, %v677
  %v699 = vsub.f32 %v651, %v679
  %v700 = vsub.f32 %v652, %v681
  %v701 = vsub.f32 %v653, %v683
  %v702 = vsub.f32 %v654, %v685
  %v703 = vsub.f32 %v655, %v687
  %v704 = vmul.f32 %v688, 1.442695
  %v705 = vpow.pop %v704
  %v706 = vmul.f32 %v689, 1.442695
  %v707 = vpow.pop %v706
  %v708 = vmul.f32 %v690, 1.442695
  %v709 = vpow.pop %v708
  %v710 = vmul.f32 %v691, 1.442695
  %v711 = vpow.pop %v710
  %v712 = vmul.f32 %v692, 1.442695
  %v713 = vpow.pop %v712
  %v714 = vmul.f32 %v693, 1.442695
  %v715 = vpow.pop %v714
  %v716 = vmul.f32 %v694, 1.442695
  %v717 = vpow.pop %v716
  %v718 = vmul.f32 %v695, 1.442695
  %v719 = vpow.pop %v718
  %v720 = vmul.f32 %v696, 1.442695
  %v721 = vpow.pop %v720
  %v722 = vmul.f32 %v697, 1.442695
  %v723 = vpow.pop %v722
  %v724 = vmul.f32 %v698, 1.442695
  %v725 = vpow.pop %v724
  %v726 = vmul.f32 %v699, 1.442695
  %v727 = vpow.pop %v726
  %v728 = vmul.f32 %v700, 1.442695
  %v729 = vpow.pop %v728
  %v730 = vmul.f32 %v701, 1.442695
  %v731 = vpow.pop %v730
  %v732 = vmul.f32 %v702, 1.442695
  %v733 = vpow.pop %v732
  %v734 = vmul.f32 %v703, 1.442695
  %v735 = vpow.pop %v734
  %736 = vadd.xlane.f32.xlu0 %v705
  %v737 = vpop.xlane.xlu0 %736
  %738 = vadd.xlane.f32.xlu0 %v707
  %v739 = vpop.xlane.xlu0 %738
  %740 = vadd.xlane.f32.xlu0 %v709
  %v741 = vpop.xlane.xlu0 %740
  %742 = vadd.xlane.f32.xlu0 %v711
  %v743 = vpop.xlane.xlu0 %742
  %744 = vadd.xlane.f32.xlu0 %v713
  %v745 = vpop.xlane.xlu0 %744
  %746 = vadd.xlane.f32.xlu0 %v715
  %v747 = vpop.xlane.xlu0 %746
  %748 = vadd.xlane.f32.xlu0 %v717
  %v749 = vpop.xlane.xlu0 %748
  %750 = vadd.xlane.f32.xlu0 %v719
  %v751 = vpop.xlane.xlu0 %750
  %752 = vadd.xlane.f32.xlu0 %v721
  %v753 = vpop.xlane.xlu0 %752
  %754 = vadd.xlane.f32.xlu0 %v723
  %v755 = vpop.xlane.xlu0 %754
  %756 = vadd.xlane.f32.xlu0 %v725
  %v757 = vpop.xlane.xlu0 %756
  %758 = vadd.xlane.f32.xlu0 %v727
  %v759 = vpop.xlane.xlu0 %758
  %760 = vadd.xlane.f32.xlu0 %v729
  %v761 = vpop.xlane.xlu0 %760
  %762 = vadd.xlane.f32.xlu0 %v731
  %v763 = vpop.xlane.xlu0 %762
  %764 = vadd.xlane.f32.xlu0 %v733
  %v765 = vpop.xlane.xlu0 %764
  %766 = vadd.xlane.f32.xlu0 %v735
  %v767 = vpop.xlane.xlu0 %766
  %v768 = vmax.f32 %v737, 1e-20
  %v769 = vmax.f32 %v739, 1e-20
  %v770 = vmax.f32 %v741, 1e-20
  %v771 = vmax.f32 %v743, 1e-20
  %v772 = vmax.f32 %v745, 1e-20
  %v773 = vmax.f32 %v747, 1e-20
  %v774 = vmax.f32 %v749, 1e-20
  %v775 = vmax.f32 %v751, 1e-20
  %v776 = vmax.f32 %v753, 1e-20
  %v777 = vmax.f32 %v755, 1e-20
  %v778 = vmax.f32 %v757, 1e-20
  %v779 = vmax.f32 %v759, 1e-20
  %v780 = vmax.f32 %v761, 1e-20
  %v781 = vmax.f32 %v763, 1e-20
  %v782 = vmax.f32 %v765, 1e-20
  %v783 = vmax.f32 %v767, 1e-20
  %v784 = vrcp.pop %v768
  %v785 = vrcp.pop %v769
  %v786 = vrcp.pop %v770
  %v787 = vrcp.pop %v771
  %v788 = vrcp.pop %v772
  %v789 = vrcp.pop %v773
  %v790 = vrcp.pop %v774
  %v791 = vrcp.pop %v775
  %v792 = vrcp.pop %v776
  %v793 = vrcp.pop %v777
  %v794 = vrcp.pop %v778
  %v795 = vrcp.pop %v779
  %v796 = vrcp.pop %v780
  %v797 = vrcp.pop %v781
  %v798 = vrcp.pop %v782
  %v799 = vrcp.pop %v783
  %v800 = vmul.f32 %v705, %v784
  %v801 = vmul.f32 %v707, %v785
  %v802 = vmul.f32 %v709, %v786
  %v803 = vmul.f32 %v711, %v787
  %v804 = vmul.f32 %v713, %v788
  %v805 = vmul.f32 %v715, %v789
  %v806 = vmul.f32 %v717, %v790
  %v807 = vmul.f32 %v719, %v791
  %v808 = vmul.f32 %v721, %v792
  %v809 = vmul.f32 %v723, %v793
  %v810 = vmul.f32 %v725, %v794
  %v811 = vmul.f32 %v727, %v795
  %v812 = vmul.f32 %v729, %v796
  %v813 = vmul.f32 %v731, %v797
  %v814 = vmul.f32 %v733, %v798
  %v815 = vmul.f32 %v735, %v799
  %v816 = vld [vmem:[%s4] sm:$0x1]
  %v817 = vlaneseq
  %v818 = vshrl.u32 %v817, 7
  %v819 = vsub.s32 0, %v818
  %v820 = vrot.slane %v816, %v819
  %v821 = vmul.f32 %v174, %v820
  %v822 = vmul.f32 %v177, %v820
  %v823 = vmul.f32 %v182, %v820
  %v824 = vmul.f32 %v185, %v820
  %v825 = vmul.f32 %v190, %v820
  %v826 = vmul.f32 %v193, %v820
  %v827 = vmul.f32 %v198, %v820
  %v828 = vmul.f32 %v201, %v820
  %v829 = vmul.f32 %v206, %v820
  %v830 = vmul.f32 %v209, %v820
  %v831 = vmul.f32 %v214, %v820
  %v832 = vmul.f32 %v217, %v820
  %v833 = vmul.f32 %v222, %v820
  %v834 = vmul.f32 %v225, %v820
  %v835 = vmul.f32 %v230, %v820
  %v836 = vmul.f32 %v233, %v820
  %v837 = vpack.c.bf16 %v801, %v800
  %v838 = vpack.c.bf16 %v803, %v802
  %v839 = vpack.c.bf16 %v805, %v804
  %v840 = vpack.c.bf16 %v807, %v806
  %v841 = vpack.c.bf16 %v809, %v808
  %v842 = vpack.c.bf16 %v811, %v810
  %v843 = vpack.c.bf16 %v813, %v812
  %v844 = vpack.c.bf16 %v815, %v814
  %v845 = vpack.c.bf16 %v822, %v821
  %v846 = vpack.c.bf16 %v824, %v823
  %v847 = vpack.c.bf16 %v826, %v825
  %v848 = vpack.c.bf16 %v828, %v827
  %v849 = vpack.c.bf16 %v830, %v829
  %v850 = vpack.c.bf16 %v832, %v831
  %v851 = vpack.c.bf16 %v834, %v833
  %v852 = vpack.c.bf16 %v836, %v835
  %853 = vset.pattern.permute.xlu0 1
  %854 = vperm.xlu0 %853, %v430
  %v855 = vpop.permute.xlu0 %854
  %857 = vset.pattern.permute.xlu0 1
  %858 = vperm.xlu0 %857, %v435
  %v859 = vpop.permute.xlu0 %858
  %861 = vset.pattern.permute.xlu0 1
  %862 = vperm.xlu0 %861, %v440
  %v863 = vpop.permute.xlu0 %862
  %865 = vset.pattern.permute.xlu0 1
  %866 = vperm.xlu0 %865, %v445
  %v867 = vpop.permute.xlu0 %866
  %869 = vset.pattern.permute.xlu0 1
  %870 = vperm.xlu0 %869, %v450
  %v871 = vpop.permute.xlu0 %870
  %873 = vset.pattern.permute.xlu0 1
  %874 = vperm.xlu0 %873, %v455
  %v875 = vpop.permute.xlu0 %874
  %877 = vset.pattern.permute.xlu0 1
  %878 = vperm.xlu0 %877, %v460
  %v879 = vpop.permute.xlu0 %878
  %881 = vset.pattern.permute.xlu0 1
  %882 = vperm.xlu0 %881, %v465
  %v883 = vpop.permute.xlu0 %882
  %885 = vset.pattern.permute.xlu0 1
  %886 = vperm.xlu0 %885, %v470
  %v887 = vpop.permute.xlu0 %886
  %889 = vset.pattern.permute.xlu0 1
  %890 = vperm.xlu0 %889, %v475
  %v891 = vpop.permute.xlu0 %890
  %893 = vset.pattern.permute.xlu0 1
  %894 = vperm.xlu0 %893, %v480
  %v895 = vpop.permute.xlu0 %894
  %897 = vset.pattern.permute.xlu0 1
  %898 = vperm.xlu0 %897, %v485
  %v899 = vpop.permute.xlu0 %898
  %901 = vset.pattern.permute.xlu0 1
  %902 = vperm.xlu0 %901, %v490
  %v903 = vpop.permute.xlu0 %902
  %905 = vset.pattern.permute.xlu0 1
  %906 = vperm.xlu0 %905, %v495
  %v907 = vpop.permute.xlu0 %906
  %909 = vset.pattern.permute.xlu0 1
  %910 = vperm.xlu0 %909, %v500
  %v911 = vpop.permute.xlu0 %910
  %913 = vset.pattern.permute.xlu0 1
  %914 = vperm.xlu0 %913, %v505
  %v915 = vpop.permute.xlu0 %914
  %v917 = vlaneseq
  %v918 = vshrl.u32 %v917, 7
  %v919 = vsub.s32 1, %v918
  %v920 = vrot.slane %v356, %v919
  %v921 = vadd.f32 %v855, %v920
  %v922 = vadd.f32 %v859, %v920
  %v923 = vadd.f32 %v863, %v920
  %v924 = vadd.f32 %v867, %v920
  %v925 = vadd.f32 %v871, %v920
  %v926 = vadd.f32 %v875, %v920
  %v927 = vadd.f32 %v879, %v920
  %v928 = vadd.f32 %v883, %v920
  %v929 = vadd.f32 %v887, %v920
  %v930 = vadd.f32 %v891, %v920
  %v931 = vadd.f32 %v895, %v920
  %v932 = vadd.f32 %v899, %v920
  %v933 = vadd.f32 %v903, %v920
  %v934 = vadd.f32 %v907, %v920
  %v935 = vadd.f32 %v911, %v920
  %v936 = vadd.f32 %v915, %v920
  %v937 = vmul.f32 %v921, 0.2
  %v938 = vmul.f32 %v922, 0.2
  %v939 = vmul.f32 %v923, 0.2
  %v940 = vmul.f32 %v924, 0.2
  %v941 = vmul.f32 %v925, 0.2
  %v942 = vmul.f32 %v926, 0.2
  %v943 = vmul.f32 %v927, 0.2
  %v944 = vmul.f32 %v928, 0.2
  %v945 = vmul.f32 %v929, 0.2
  %v946 = vmul.f32 %v930, 0.2
  %v947 = vmul.f32 %v931, 0.2
  %v948 = vmul.f32 %v932, 0.2
  %v949 = vmul.f32 %v933, 0.2
  %v950 = vmul.f32 %v934, 0.2
  %v951 = vmul.f32 %v935, 0.2
  %v952 = vmul.f32 %v936, 0.2
  %v953 = vmax.f32 %v921, %v937
  %v954 = vmax.f32 %v922, %v938
  %v955 = vmax.f32 %v923, %v939
  %v956 = vmax.f32 %v924, %v940
  %v957 = vmax.f32 %v925, %v941
  %v958 = vmax.f32 %v926, %v942
  %v959 = vmax.f32 %v927, %v943
  %v960 = vmax.f32 %v928, %v944
  %v961 = vmax.f32 %v929, %v945
  %v962 = vmax.f32 %v930, %v946
  %v963 = vmax.f32 %v931, %v947
  %v964 = vmax.f32 %v932, %v948
  %v965 = vmax.f32 %v933, %v949
  %v966 = vmax.f32 %v934, %v950
  %v967 = vmax.f32 %v935, %v951
  %v968 = vmax.f32 %v936, %v952
  %v969 = vadd.f32 %v953, %v71
  %v970 = vadd.f32 %v954, %v72
  %v971 = vadd.f32 %v955, %v73
  %v972 = vadd.f32 %v956, %v74
  %v973 = vadd.f32 %v957, %v75
  %v974 = vadd.f32 %v958, %v76
  %v975 = vadd.f32 %v959, %v77
  %v976 = vadd.f32 %v960, %v78
  %v977 = vadd.f32 %v961, %v79
  %v978 = vadd.f32 %v962, %v80
  %v979 = vadd.f32 %v963, %v81
  %v980 = vadd.f32 %v964, %v82
  %v981 = vadd.f32 %v965, %v83
  %v982 = vadd.f32 %v966, %v84
  %v983 = vadd.f32 %v967, %v85
  %v984 = vadd.f32 %v968, %v86
  %985 = vmax.xlane.f32.xlu0 %v969
  %v986 = vpop.xlane.xlu0 %985
  %987 = vmax.xlane.f32.xlu0 %v970
  %v988 = vpop.xlane.xlu0 %987
  %989 = vmax.xlane.f32.xlu0 %v971
  %v990 = vpop.xlane.xlu0 %989
  %991 = vmax.xlane.f32.xlu0 %v972
  %v992 = vpop.xlane.xlu0 %991
  %993 = vmax.xlane.f32.xlu0 %v973
  %v994 = vpop.xlane.xlu0 %993
  %995 = vmax.xlane.f32.xlu0 %v974
  %v996 = vpop.xlane.xlu0 %995
  %997 = vmax.xlane.f32.xlu0 %v975
  %v998 = vpop.xlane.xlu0 %997
  %999 = vmax.xlane.f32.xlu0 %v976
  %v1000 = vpop.xlane.xlu0 %999
  %1001 = vmax.xlane.f32.xlu0 %v977
  %v1002 = vpop.xlane.xlu0 %1001
  %1003 = vmax.xlane.f32.xlu0 %v978
  %v1004 = vpop.xlane.xlu0 %1003
  %1005 = vmax.xlane.f32.xlu0 %v979
  %v1006 = vpop.xlane.xlu0 %1005
  %1007 = vmax.xlane.f32.xlu0 %v980
  %v1008 = vpop.xlane.xlu0 %1007
  %1009 = vmax.xlane.f32.xlu0 %v981
  %v1010 = vpop.xlane.xlu0 %1009
  %1011 = vmax.xlane.f32.xlu0 %v982
  %v1012 = vpop.xlane.xlu0 %1011
  %1013 = vmax.xlane.f32.xlu0 %v983
  %v1014 = vpop.xlane.xlu0 %1013
  %1015 = vmax.xlane.f32.xlu0 %v984
  %v1016 = vpop.xlane.xlu0 %1015
  %v1017 = vsub.f32 %v969, %v986
  %v1018 = vsub.f32 %v970, %v988
  %v1019 = vsub.f32 %v971, %v990
  %v1020 = vsub.f32 %v972, %v992
  %v1021 = vsub.f32 %v973, %v994
  %v1022 = vsub.f32 %v974, %v996
  %v1023 = vsub.f32 %v975, %v998
  %v1024 = vsub.f32 %v976, %v1000
  %v1025 = vsub.f32 %v977, %v1002
  %v1026 = vsub.f32 %v978, %v1004
  %v1027 = vsub.f32 %v979, %v1006
  %v1028 = vsub.f32 %v980, %v1008
  %v1029 = vsub.f32 %v981, %v1010
  %v1030 = vsub.f32 %v982, %v1012
  %v1031 = vsub.f32 %v983, %v1014
  %v1032 = vsub.f32 %v984, %v1016
  %v1033 = vmul.f32 %v1017, 1.442695
  %v1034 = vpow.pop %v1033
  %v1035 = vmul.f32 %v1018, 1.442695
  %v1036 = vpow.pop %v1035
  %v1037 = vmul.f32 %v1019, 1.442695
  %v1038 = vpow.pop %v1037
  %v1039 = vmul.f32 %v1020, 1.442695
  %v1040 = vpow.pop %v1039
  %v1041 = vmul.f32 %v1021, 1.442695
  %v1042 = vpow.pop %v1041
  %v1043 = vmul.f32 %v1022, 1.442695
  %v1044 = vpow.pop %v1043
  %v1045 = vmul.f32 %v1023, 1.442695
  %v1046 = vpow.pop %v1045
  %v1047 = vmul.f32 %v1024, 1.442695
  %v1048 = vpow.pop %v1047
  %v1049 = vmul.f32 %v1025, 1.442695
  %v1050 = vpow.pop %v1049
  %v1051 = vmul.f32 %v1026, 1.442695
  %v1052 = vpow.pop %v1051
  %v1053 = vmul.f32 %v1027, 1.442695
  %v1054 = vpow.pop %v1053
  %v1055 = vmul.f32 %v1028, 1.442695
  %v1056 = vpow.pop %v1055
  %v1057 = vmul.f32 %v1029, 1.442695
  %v1058 = vpow.pop %v1057
  %v1059 = vmul.f32 %v1030, 1.442695
  %v1060 = vpow.pop %v1059
  %v1061 = vmul.f32 %v1031, 1.442695
  %v1062 = vpow.pop %v1061
  %v1063 = vmul.f32 %v1032, 1.442695
  %v1064 = vpow.pop %v1063
  %1065 = vadd.xlane.f32.xlu0 %v1034
  %v1066 = vpop.xlane.xlu0 %1065
  %1067 = vadd.xlane.f32.xlu0 %v1036
  %v1068 = vpop.xlane.xlu0 %1067
  %1069 = vadd.xlane.f32.xlu0 %v1038
  %v1070 = vpop.xlane.xlu0 %1069
  %1071 = vadd.xlane.f32.xlu0 %v1040
  %v1072 = vpop.xlane.xlu0 %1071
  %1073 = vadd.xlane.f32.xlu0 %v1042
  %v1074 = vpop.xlane.xlu0 %1073
  %1075 = vadd.xlane.f32.xlu0 %v1044
  %v1076 = vpop.xlane.xlu0 %1075
  %1077 = vadd.xlane.f32.xlu0 %v1046
  %v1078 = vpop.xlane.xlu0 %1077
  %1079 = vadd.xlane.f32.xlu0 %v1048
  %v1080 = vpop.xlane.xlu0 %1079
  %1081 = vadd.xlane.f32.xlu0 %v1050
  %v1082 = vpop.xlane.xlu0 %1081
  %1083 = vadd.xlane.f32.xlu0 %v1052
  %v1084 = vpop.xlane.xlu0 %1083
  %1085 = vadd.xlane.f32.xlu0 %v1054
  %v1086 = vpop.xlane.xlu0 %1085
  %1087 = vadd.xlane.f32.xlu0 %v1056
  %v1088 = vpop.xlane.xlu0 %1087
  %1089 = vadd.xlane.f32.xlu0 %v1058
  %v1090 = vpop.xlane.xlu0 %1089
  %1091 = vadd.xlane.f32.xlu0 %v1060
  %v1092 = vpop.xlane.xlu0 %1091
  %1093 = vadd.xlane.f32.xlu0 %v1062
  %v1094 = vpop.xlane.xlu0 %1093
  %1095 = vadd.xlane.f32.xlu0 %v1064
  %v1096 = vpop.xlane.xlu0 %1095
  %v1097 = vmax.f32 %v1066, 1e-20
  %v1098 = vmax.f32 %v1068, 1e-20
  %v1099 = vmax.f32 %v1070, 1e-20
  %v1100 = vmax.f32 %v1072, 1e-20
  %v1101 = vmax.f32 %v1074, 1e-20
  %v1102 = vmax.f32 %v1076, 1e-20
  %v1103 = vmax.f32 %v1078, 1e-20
  %v1104 = vmax.f32 %v1080, 1e-20
  %v1105 = vmax.f32 %v1082, 1e-20
  %v1106 = vmax.f32 %v1084, 1e-20
  %v1107 = vmax.f32 %v1086, 1e-20
  %v1108 = vmax.f32 %v1088, 1e-20
  %v1109 = vmax.f32 %v1090, 1e-20
  %v1110 = vmax.f32 %v1092, 1e-20
  %v1111 = vmax.f32 %v1094, 1e-20
  %v1112 = vmax.f32 %v1096, 1e-20
  %v1113 = vrcp.pop %v1097
  %v1114 = vrcp.pop %v1098
  %v1115 = vrcp.pop %v1099
  %v1116 = vrcp.pop %v1100
  %v1117 = vrcp.pop %v1101
  %v1118 = vrcp.pop %v1102
  %v1119 = vrcp.pop %v1103
  %v1120 = vrcp.pop %v1104
  %v1121 = vrcp.pop %v1105
  %v1122 = vrcp.pop %v1106
  %v1123 = vrcp.pop %v1107
  %v1124 = vrcp.pop %v1108
  %v1125 = vrcp.pop %v1109
  %v1126 = vrcp.pop %v1110
  %v1127 = vrcp.pop %v1111
  %v1128 = vrcp.pop %v1112
  %v1129 = vmul.f32 %v1034, %v1113
  %v1130 = vmul.f32 %v1036, %v1114
  %v1131 = vmul.f32 %v1038, %v1115
  %v1132 = vmul.f32 %v1040, %v1116
  %v1133 = vmul.f32 %v1042, %v1117
  %v1134 = vmul.f32 %v1044, %v1118
  %v1135 = vmul.f32 %v1046, %v1119
  %v1136 = vmul.f32 %v1048, %v1120
  %v1137 = vmul.f32 %v1050, %v1121
  %v1138 = vmul.f32 %v1052, %v1122
  %v1139 = vmul.f32 %v1054, %v1123
  %v1140 = vmul.f32 %v1056, %v1124
  %v1141 = vmul.f32 %v1058, %v1125
  %v1142 = vmul.f32 %v1060, %v1126
  %v1143 = vmul.f32 %v1062, %v1127
  %v1144 = vmul.f32 %v1064, %v1128
  %v1145 = vld [vmem:[%s4 + $0x1] sm:$0x1]
  %v1146 = vlaneseq
  %v1147 = vshrl.u32 %v1146, 7
  %v1148 = vsub.s32 0, %v1147
  %v1149 = vrot.slane %v1145, %v1148
  %v1150 = vmul.f32 %v174, %v1149
  %v1151 = vmul.f32 %v177, %v1149
  %v1152 = vmul.f32 %v182, %v1149
  %v1153 = vmul.f32 %v185, %v1149
  %v1154 = vmul.f32 %v190, %v1149
  %v1155 = vmul.f32 %v193, %v1149
  %v1156 = vmul.f32 %v198, %v1149
  %v1157 = vmul.f32 %v201, %v1149
  %v1158 = vmul.f32 %v206, %v1149
  %v1159 = vmul.f32 %v209, %v1149
  %v1160 = vmul.f32 %v214, %v1149
  %v1161 = vmul.f32 %v217, %v1149
  %v1162 = vmul.f32 %v222, %v1149
  %v1163 = vmul.f32 %v225, %v1149
  %v1164 = vmul.f32 %v230, %v1149
  %v1165 = vmul.f32 %v233, %v1149
  %v1166 = vpack.c.bf16 %v1130, %v1129
  %v1167 = vpack.c.bf16 %v1132, %v1131
  %v1168 = vpack.c.bf16 %v1134, %v1133
  %v1169 = vpack.c.bf16 %v1136, %v1135
  %v1170 = vpack.c.bf16 %v1138, %v1137
  %v1171 = vpack.c.bf16 %v1140, %v1139
  %v1172 = vpack.c.bf16 %v1142, %v1141
  %v1173 = vpack.c.bf16 %v1144, %v1143
  %v1174 = vpack.c.bf16 %v1151, %v1150
  %v1175 = vpack.c.bf16 %v1153, %v1152
  %v1176 = vpack.c.bf16 %v1155, %v1154
  %v1177 = vpack.c.bf16 %v1157, %v1156
  %v1178 = vpack.c.bf16 %v1159, %v1158
  %v1179 = vpack.c.bf16 %v1161, %v1160
  %v1180 = vpack.c.bf16 %v1163, %v1162
  %v1181 = vpack.c.bf16 %v1165, %v1164
  %1182 = vmatprep.subr.bf16.mxu0 0
  %1183 = vmatpush1.bf16.msra.mxu0 %v1181
  %1184 = vmatprep.subr.bf16.mxu0 0
  %1185 = vmatpush1.bf16.msra.mxu0 %v1180
  %1186 = vmatprep.subr.bf16.mxu0 0
  %1187 = vmatpush1.bf16.msra.mxu0 %v1179
  %1188 = vmatprep.subr.bf16.mxu0 0
  %1189 = vmatpush1.bf16.msra.mxu0 %v1178
  %1190 = vmatprep.subr.bf16.mxu0 0
  %1191 = vmatpush1.bf16.msra.mxu0 %v1177
  %1192 = vmatprep.subr.bf16.mxu0 0
  %1193 = vmatpush1.bf16.msra.mxu0 %v1176
  %1194 = vmatprep.subr.bf16.mxu0 0
  %1195 = vmatpush1.bf16.msra.mxu0 %v1175
  %1196 = vmatprep.subr.bf16.mxu0 0
  %1197 = vmatpush1.bf16.msra.mxu0 %v1174
  %1198 = vmatprep.subr.bf16.mxu0 0
  %1199 = vmatpush2.bf16.msra.mxu0 0
  %1200 = vmatprep.subr.bf16.mxu0 0
  %1201 = vmatpush2.bf16.msra.mxu0 0
  %1202 = vmatprep.subr.bf16.mxu0 0
  %1203 = vmatpush2.bf16.msra.mxu0 0
  %1204 = vmatprep.subr.bf16.mxu0 0
  %1205 = vmatpush2.bf16.msra.mxu0 0
  %1206 = vmatprep.subr.bf16.mxu0 0
  %1207 = vmatpush2.bf16.msra.mxu0 0
  %1208 = vmatprep.subr.bf16.mxu0 0
  %1209 = vmatpush2.bf16.msra.mxu0 0
  %1210 = vmatprep.subr.bf16.mxu0 0
  %1211 = vmatpush2.bf16.msra.mxu0 0
  %1212 = vmatprep.subr.bf16.mxu0 0
  %1213 = vmatpush2.bf16.msra.mxu0 0
  %1214 = vmatprep.mubr.bf16.mxu0 0
  %1215 = vmatmul.mubr.bf16.gmra.mxu0 %v1166
  %v1216 = vpop.f32.mrf.mxu0
  %v1217 = vadd.f32 0.0, %v1216
  %v1218 = vpop.f32.mrf.mxu0
  %v1219 = vpop.f32.mrf.mxu0
  %v1220 = vadd.f32 0.0, %v1219
  %v1221 = vpop.f32.mrf.mxu0
  %1222 = vmatprep.mubr.bf16.mxu0 0
  %1223 = vmatmul.mubr.bf16.gmra.mxu0 %v1167
  %v1224 = vpop.f32.mrf.mxu0
  %v1225 = vadd.f32 0.0, %v1224
  %v1226 = vpop.f32.mrf.mxu0
  %v1227 = vpop.f32.mrf.mxu0
  %v1228 = vadd.f32 0.0, %v1227
  %v1229 = vpop.f32.mrf.mxu0
  %1230 = vmatprep.mubr.bf16.mxu0 0
  %1231 = vmatmul.mubr.bf16.gmra.mxu0 %v1168
  %v1232 = vpop.f32.mrf.mxu0
  %v1233 = vadd.f32 0.0, %v1232
  %v1234 = vpop.f32.mrf.mxu0
  %v1235 = vpop.f32.mrf.mxu0
  %v1236 = vadd.f32 0.0, %v1235
  %v1237 = vpop.f32.mrf.mxu0
  %1238 = vmatprep.mubr.bf16.mxu0 0
  %1239 = vmatmul.mubr.bf16.gmra.mxu0 %v1169
  %v1240 = vpop.f32.mrf.mxu0
  %v1241 = vadd.f32 0.0, %v1240
  %v1242 = vpop.f32.mrf.mxu0
  %v1243 = vpop.f32.mrf.mxu0
  %v1244 = vadd.f32 0.0, %v1243
  %v1245 = vpop.f32.mrf.mxu0
  %1246 = vmatprep.mubr.bf16.mxu0 0
  %1247 = vmatmul.mubr.bf16.gmra.mxu0 %v1170
  %v1248 = vpop.f32.mrf.mxu0
  %v1249 = vadd.f32 0.0, %v1248
  %v1250 = vpop.f32.mrf.mxu0
  %v1251 = vpop.f32.mrf.mxu0
  %v1252 = vadd.f32 0.0, %v1251
  %v1253 = vpop.f32.mrf.mxu0
  %1254 = vmatprep.mubr.bf16.mxu0 0
  %1255 = vmatmul.mubr.bf16.gmra.mxu0 %v1171
  %v1256 = vpop.f32.mrf.mxu0
  %v1257 = vadd.f32 0.0, %v1256
  %v1258 = vpop.f32.mrf.mxu0
  %v1259 = vpop.f32.mrf.mxu0
  %v1260 = vadd.f32 0.0, %v1259
  %v1261 = vpop.f32.mrf.mxu0
  %1262 = vmatprep.mubr.bf16.mxu0 0
  %1263 = vmatmul.mubr.bf16.gmra.mxu0 %v1172
  %v1264 = vpop.f32.mrf.mxu0
  %v1265 = vadd.f32 0.0, %v1264
  %v1266 = vpop.f32.mrf.mxu0
  %v1267 = vpop.f32.mrf.mxu0
  %v1268 = vadd.f32 0.0, %v1267
  %v1269 = vpop.f32.mrf.mxu0
  %1270 = vmatprep.mubr.bf16.mxu0 0
  %1271 = vmatmul.mubr.bf16.gmra.mxu0 %v1173
  %v1272 = vpop.f32.mrf.mxu0
  %v1273 = vadd.f32 0.0, %v1272
  %v1274 = vpop.f32.mrf.mxu0
  %v1275 = vpop.f32.mrf.mxu0
  %v1276 = vadd.f32 0.0, %v1275
  %v1277 = vpop.f32.mrf.mxu0
  %1278 = vdwg.mxu0
  %1279 = vmatprep.subr.bf16.mxu0 0
  %1280 = vmatpush1.bf16.msra.mxu0 %v852
  %1281 = vmatprep.subr.bf16.mxu0 0
  %1282 = vmatpush1.bf16.msra.mxu0 %v851
  %1283 = vmatprep.subr.bf16.mxu0 0
  %1284 = vmatpush1.bf16.msra.mxu0 %v850
  %1285 = vmatprep.subr.bf16.mxu0 0
  %1286 = vmatpush1.bf16.msra.mxu0 %v849
  %1287 = vmatprep.subr.bf16.mxu0 0
  %1288 = vmatpush1.bf16.msra.mxu0 %v848
  %1289 = vmatprep.subr.bf16.mxu0 0
  %1290 = vmatpush1.bf16.msra.mxu0 %v847
  %1291 = vmatprep.subr.bf16.mxu0 0
  %1292 = vmatpush1.bf16.msra.mxu0 %v846
  %1293 = vmatprep.subr.bf16.mxu0 0
  %1294 = vmatpush1.bf16.msra.mxu0 %v845
  %1295 = vmatprep.subr.bf16.mxu0 0
  %1296 = vmatpush2.bf16.msra.mxu0 0
  %1297 = vmatprep.subr.bf16.mxu0 0
  %1298 = vmatpush2.bf16.msra.mxu0 0
  %1299 = vmatprep.subr.bf16.mxu0 0
  %1300 = vmatpush2.bf16.msra.mxu0 0
  %1301 = vmatprep.subr.bf16.mxu0 0
  %1302 = vmatpush2.bf16.msra.mxu0 0
  %1303 = vmatprep.subr.bf16.mxu0 0
  %1304 = vmatpush2.bf16.msra.mxu0 0
  %1305 = vmatprep.subr.bf16.mxu0 0
  %1306 = vmatpush2.bf16.msra.mxu0 0
  %1307 = vmatprep.subr.bf16.mxu0 0
  %1308 = vmatpush2.bf16.msra.mxu0 0
  %1309 = vmatprep.subr.bf16.mxu0 0
  %1310 = vmatpush2.bf16.msra.mxu0 0
  %1311 = vmatprep.mubr.bf16.mxu0 0
  %1312 = vmatmul.mubr.bf16.gmra.mxu0 %v837
  %v1313 = vpop.f32.mrf.mxu0
  %v1314 = vadd.f32 %v1217, %v1313
  %v1315 = vpop.f32.mrf.mxu0
  %v1316 = vpop.f32.mrf.mxu0
  %v1317 = vadd.f32 %v1220, %v1316
  %v1318 = vpop.f32.mrf.mxu0
  %1319 = vmatprep.mubr.bf16.mxu0 0
  %1320 = vmatmul.mubr.bf16.gmra.mxu0 %v838
  %v1321 = vpop.f32.mrf.mxu0
  %v1322 = vadd.f32 %v1225, %v1321
  %v1323 = vpop.f32.mrf.mxu0
  %v1324 = vpop.f32.mrf.mxu0
  %v1325 = vadd.f32 %v1228, %v1324
  %v1326 = vpop.f32.mrf.mxu0
  %1327 = vmatprep.mubr.bf16.mxu0 0
  %1328 = vmatmul.mubr.bf16.gmra.mxu0 %v839
  %v1329 = vpop.f32.mrf.mxu0
  %v1330 = vadd.f32 %v1233, %v1329
  %v1331 = vpop.f32.mrf.mxu0
  %v1332 = vpop.f32.mrf.mxu0
  %v1333 = vadd.f32 %v1236, %v1332
  %v1334 = vpop.f32.mrf.mxu0
  %1335 = vmatprep.mubr.bf16.mxu0 0
  %1336 = vmatmul.mubr.bf16.gmra.mxu0 %v840
  %v1337 = vpop.f32.mrf.mxu0
  %v1338 = vadd.f32 %v1241, %v1337
  %v1339 = vpop.f32.mrf.mxu0
  %v1340 = vpop.f32.mrf.mxu0
  %v1341 = vadd.f32 %v1244, %v1340
  %v1342 = vpop.f32.mrf.mxu0
  %1343 = vmatprep.mubr.bf16.mxu0 0
  %1344 = vmatmul.mubr.bf16.gmra.mxu0 %v841
  %v1345 = vpop.f32.mrf.mxu0
  %v1346 = vadd.f32 %v1249, %v1345
  %v1347 = vpop.f32.mrf.mxu0
  %v1348 = vpop.f32.mrf.mxu0
  %v1349 = vadd.f32 %v1252, %v1348
  %v1350 = vpop.f32.mrf.mxu0
  %1351 = vmatprep.mubr.bf16.mxu0 0
  %1352 = vmatmul.mubr.bf16.gmra.mxu0 %v842
  %v1353 = vpop.f32.mrf.mxu0
  %v1354 = vadd.f32 %v1257, %v1353
  %v1355 = vpop.f32.mrf.mxu0
  %v1356 = vpop.f32.mrf.mxu0
  %v1357 = vadd.f32 %v1260, %v1356
  %v1358 = vpop.f32.mrf.mxu0
  %1359 = vmatprep.mubr.bf16.mxu0 0
  %1360 = vmatmul.mubr.bf16.gmra.mxu0 %v843
  %v1361 = vpop.f32.mrf.mxu0
  %v1362 = vadd.f32 %v1265, %v1361
  %v1363 = vpop.f32.mrf.mxu0
  %v1364 = vpop.f32.mrf.mxu0
  %v1365 = vadd.f32 %v1268, %v1364
  %v1366 = vpop.f32.mrf.mxu0
  %1367 = vmatprep.mubr.bf16.mxu0 0
  %1368 = vmatmul.mubr.bf16.gmra.mxu0 %v844
  %v1369 = vpop.f32.mrf.mxu0
  %v1370 = vadd.f32 %v1273, %v1369
  %v1371 = vpop.f32.mrf.mxu0
  %v1372 = vpop.f32.mrf.mxu0
  %v1373 = vadd.f32 %v1276, %v1372
  %v1374 = vpop.f32.mrf.mxu0
  %1375 = vdwg.mxu0
  %v1376 = vld [vmem:[%s5] sm:$0x1]
  %v1378 = vlaneseq
  %v1379 = vshrl.u32 %v1378, 7
  %v1380 = vsub.s32 0, %v1379
  %v1381 = vrot.slane %v1376, %v1380
  %v1383 = vadd.f32 %v1314, %v1381
  %v1384 = vadd.f32 %v1317, %v1381
  %v1385 = vadd.f32 %v1322, %v1381
  %v1386 = vadd.f32 %v1325, %v1381
  %v1387 = vadd.f32 %v1330, %v1381
  %v1388 = vadd.f32 %v1333, %v1381
  %v1389 = vadd.f32 %v1338, %v1381
  %v1390 = vadd.f32 %v1341, %v1381
  %v1391 = vadd.f32 %v1346, %v1381
  %v1392 = vadd.f32 %v1349, %v1381
  %v1393 = vadd.f32 %v1354, %v1381
  %v1394 = vadd.f32 %v1357, %v1381
  %v1395 = vadd.f32 %v1362, %v1381
  %v1396 = vadd.f32 %v1365, %v1381
  %v1397 = vadd.f32 %v1370, %v1381
  %v1398 = vadd.f32 %v1373, %v1381
  %v1399 = vmax.f32 %v1383, 0.0
  %v1400 = vmax.f32 %v1384, 0.0
  %v1401 = vmax.f32 %v1385, 0.0
  %v1402 = vmax.f32 %v1386, 0.0
  %v1403 = vmax.f32 %v1387, 0.0
  %v1404 = vmax.f32 %v1388, 0.0
  %v1405 = vmax.f32 %v1389, 0.0
  %v1406 = vmax.f32 %v1390, 0.0
  %v1407 = vmax.f32 %v1391, 0.0
  %v1408 = vmax.f32 %v1392, 0.0
  %v1409 = vmax.f32 %v1393, 0.0
  %v1410 = vmax.f32 %v1394, 0.0
  %v1411 = vmax.f32 %v1395, 0.0
  %v1412 = vmax.f32 %v1396, 0.0
  %v1413 = vmax.f32 %v1397, 0.0
  %v1414 = vmax.f32 %v1398, 0.0
  %v1415 = vpack.c.bf16 %v1400, %v1399
  %v1416 = vpack.c.bf16 %v1402, %v1401
  %v1417 = vpack.c.bf16 %v1404, %v1403
  %v1418 = vpack.c.bf16 %v1406, %v1405
  %v1419 = vpack.c.bf16 %v1408, %v1407
  %v1420 = vpack.c.bf16 %v1410, %v1409
  %v1421 = vpack.c.bf16 %v1412, %v1411
  %v1422 = vpack.c.bf16 %v1414, %v1413
  %v1423 = vld [vmem:[%s6] sm:$0xff]
  %v1424 = vld [vmem:[%s6 + $0x8] sm:$0xff]
  %v1425 = vld [vmem:[%s6 + $0x10] sm:$0xff]
  %v1426 = vld [vmem:[%s6 + $0x18] sm:$0xff]
  %v1427 = vpack.c.bf16 %v1424, %v1423
  %v1428 = vpack.c.bf16 %v1426, %v1425
  %v1430 = vsel %vm237, %v1415, 0
  %v1433 = vsel %vm237, %v1416, 0
  %v1436 = vsel %vm237, %v1417, 0
  %v1439 = vsel %vm237, %v1418, 0
  %v1442 = vsel %vm237, %v1419, 0
  %v1445 = vsel %vm237, %v1420, 0
  %v1448 = vsel %vm237, %v1421, 0
  %v1451 = vsel %vm237, %v1422, 0
  %1453 = vmatprep.subr.bf16.mxu0 0
  %1454 = vmatpush1.bf16.msra.mxu0 0
  %1455 = vmatprep.subr.bf16.mxu0 0
  %1456 = vmatpush1.bf16.msra.mxu0 0
  %1457 = vmatprep.subr.bf16.mxu0 0
  %1458 = vmatpush1.bf16.msra.mxu0 0
  %1459 = vmatprep.subr.bf16.mxu0 0
  %1460 = vmatpush1.bf16.msra.mxu0 0
  %1461 = vmatprep.subr.bf16.mxu0 0
  %1462 = vmatpush1.bf16.msra.mxu0 0
  %1463 = vmatprep.subr.bf16.mxu0 0
  %1464 = vmatpush1.bf16.msra.mxu0 0
  %1465 = vmatprep.subr.bf16.mxu0 0
  %1466 = vmatpush1.bf16.msra.mxu0 %v1428
  %1467 = vmatprep.subr.bf16.mxu0 0
  %1468 = vmatpush1.bf16.msra.mxu0 %v1427
  %1469 = vmatprep.subr.bf16.mxu0 0
  %1470 = vmatpush2.bf16.msra.mxu0 0
  %1471 = vmatprep.subr.bf16.mxu0 0
  %1472 = vmatpush2.bf16.msra.mxu0 0
  %1473 = vmatprep.subr.bf16.mxu0 0
  %1474 = vmatpush2.bf16.msra.mxu0 0
  %1475 = vmatprep.subr.bf16.mxu0 0
  %1476 = vmatpush2.bf16.msra.mxu0 0
  %1477 = vmatprep.subr.bf16.mxu0 0
  %1478 = vmatpush2.bf16.msra.mxu0 0
  %1479 = vmatprep.subr.bf16.mxu0 0
  %1480 = vmatpush2.bf16.msra.mxu0 0
  %1481 = vmatprep.subr.bf16.mxu0 0
  %1482 = vmatpush2.bf16.msra.mxu0 0
  %1483 = vmatprep.subr.bf16.mxu0 0
  %1484 = vmatpush2.bf16.msra.mxu0 0
  %1485 = vmatprep.mubr.bf16.mxu0 0
  %1486 = vmatmul.mubr.bf16.gmra.mxu0 %v1430
  %v1487 = vpop.f32.mrf.mxu0
  %v1488 = vadd.f32 0.0, %v1487
  %v1489 = vpop.f32.mrf.mxu0
  %v1490 = vpop.f32.mrf.mxu0
  %v1491 = vadd.f32 0.0, %v1490
  %v1492 = vpop.f32.mrf.mxu0
  %1493 = vmatprep.mubr.bf16.mxu0 0
  %1494 = vmatmul.mubr.bf16.gmra.mxu0 %v1433
  %v1495 = vpop.f32.mrf.mxu0
  %v1496 = vadd.f32 0.0, %v1495
  %v1497 = vpop.f32.mrf.mxu0
  %v1498 = vpop.f32.mrf.mxu0
  %v1499 = vadd.f32 0.0, %v1498
  %v1500 = vpop.f32.mrf.mxu0
  %1501 = vmatprep.mubr.bf16.mxu0 0
  %1502 = vmatmul.mubr.bf16.gmra.mxu0 %v1436
  %v1503 = vpop.f32.mrf.mxu0
  %v1504 = vadd.f32 0.0, %v1503
  %v1505 = vpop.f32.mrf.mxu0
  %v1506 = vpop.f32.mrf.mxu0
  %v1507 = vadd.f32 0.0, %v1506
  %v1508 = vpop.f32.mrf.mxu0
  %1509 = vmatprep.mubr.bf16.mxu0 0
  %1510 = vmatmul.mubr.bf16.gmra.mxu0 %v1439
  %v1511 = vpop.f32.mrf.mxu0
  %v1512 = vadd.f32 0.0, %v1511
  %v1513 = vpop.f32.mrf.mxu0
  %v1514 = vpop.f32.mrf.mxu0
  %v1515 = vadd.f32 0.0, %v1514
  %v1516 = vpop.f32.mrf.mxu0
  %1517 = vmatprep.mubr.bf16.mxu0 0
  %1518 = vmatmul.mubr.bf16.gmra.mxu0 %v1442
  %v1519 = vpop.f32.mrf.mxu0
  %v1520 = vadd.f32 0.0, %v1519
  %v1521 = vpop.f32.mrf.mxu0
  %v1522 = vpop.f32.mrf.mxu0
  %v1523 = vadd.f32 0.0, %v1522
  %v1524 = vpop.f32.mrf.mxu0
  %1525 = vmatprep.mubr.bf16.mxu0 0
  %1526 = vmatmul.mubr.bf16.gmra.mxu0 %v1445
  %v1527 = vpop.f32.mrf.mxu0
  %v1528 = vadd.f32 0.0, %v1527
  %v1529 = vpop.f32.mrf.mxu0
  %v1530 = vpop.f32.mrf.mxu0
  %v1531 = vadd.f32 0.0, %v1530
  %v1532 = vpop.f32.mrf.mxu0
  %1533 = vmatprep.mubr.bf16.mxu0 0
  %1534 = vmatmul.mubr.bf16.gmra.mxu0 %v1448
  %v1535 = vpop.f32.mrf.mxu0
  %v1536 = vadd.f32 0.0, %v1535
  %v1537 = vpop.f32.mrf.mxu0
  %v1538 = vpop.f32.mrf.mxu0
  %v1539 = vadd.f32 0.0, %v1538
  %v1540 = vpop.f32.mrf.mxu0
  %1541 = vmatprep.mubr.bf16.mxu0 0
  %1542 = vmatmul.mubr.bf16.gmra.mxu0 %v1451
  %v1543 = vpop.f32.mrf.mxu0
  %v1544 = vadd.f32 0.0, %v1543
  %v1545 = vpop.f32.mrf.mxu0
  %v1546 = vpop.f32.mrf.mxu0
  %v1547 = vadd.f32 0.0, %v1546
  %v1548 = vpop.f32.mrf.mxu0
  %1549 = vdwg.mxu0
  %v1550 = vld [vmem:[%s7] sm:$0x1]
  %vm1551 = vcmask 64512
  %v1553 = vsel %vm1551, %v1550, 0
  %v1556 = vsel %vm1551, %v1488, 0
  %v1559 = vsel %vm1551, %v1491, 0
  %v1562 = vsel %vm1551, %v1496, 0
  %v1565 = vsel %vm1551, %v1499, 0
  %v1568 = vsel %vm1551, %v1504, 0
  %v1571 = vsel %vm1551, %v1507, 0
  %v1574 = vsel %vm1551, %v1512, 0
  %v1577 = vsel %vm1551, %v1515, 0
  %v1580 = vsel %vm1551, %v1520, 0
  %v1583 = vsel %vm1551, %v1523, 0
  %v1586 = vsel %vm1551, %v1528, 0
  %v1589 = vsel %vm1551, %v1531, 0
  %v1592 = vsel %vm1551, %v1536, 0
  %v1595 = vsel %vm1551, %v1539, 0
  %v1598 = vsel %vm1551, %v1544, 0
  %v1601 = vsel %vm1551, %v1547, 0
  %1603 = vmatprep.subr.mxu0 0.0
  %1604 = vmatpush1.xpose.msra.mxu0 %v1601
  %1605 = vmatprep.subr.mxu0 0.0
  %1606 = vmatpush1.xpose.msra.mxu0 %v1598
  %1607 = vmatprep.subr.mxu0 0.0
  %1608 = vmatpush1.xpose.msra.mxu0 %v1595
  %1609 = vmatprep.subr.mxu0 0.0
  %1610 = vmatpush1.xpose.msra.mxu0 %v1592
  %1611 = vmatprep.subr.mxu0 0.0
  %1612 = vmatpush1.xpose.msra.mxu0 %v1589
  %1613 = vmatprep.subr.mxu0 0.0
  %1614 = vmatpush1.xpose.msra.mxu0 %v1586
  %1615 = vmatprep.subr.mxu0 0.0
  %1616 = vmatpush1.xpose.msra.mxu0 %v1583
  %1617 = vmatprep.subr.mxu0 0.0
  %1618 = vmatpush1.xpose.msra.mxu0 %v1580
  %1619 = vmatprep.subr.mxu0 0.0
  %1620 = vmatpush1.xpose.msra.mxu0 %v1577
  %1621 = vmatprep.subr.mxu0 0.0
  %1622 = vmatpush1.xpose.msra.mxu0 %v1574
  %1623 = vmatprep.subr.mxu0 0.0
  %1624 = vmatpush1.xpose.msra.mxu0 %v1571
  %1625 = vmatprep.subr.mxu0 0.0
  %1626 = vmatpush1.xpose.msra.mxu0 %v1568
  %1627 = vmatprep.subr.mxu0 0.0
  %1628 = vmatpush1.xpose.msra.mxu0 %v1565
  %1629 = vmatprep.subr.mxu0 0.0
  %1630 = vmatpush1.xpose.msra.mxu0 %v1562
  %1631 = vmatprep.subr.mxu0 0.0
  %1632 = vmatpush1.xpose.msra.mxu0 %v1559
  %1633 = vmatprep.subr.mxu0 0.0
  %1634 = vmatpush1.xpose.msra.mxu0 %v1556
  %1635 = vmatprep.subr.mxu0 0.0
  %1636 = vmatpush2.xpose.msra.mxu0 0.0
  %1637 = vmatprep.subr.mxu0 0.0
  %1638 = vmatpush2.xpose.msra.mxu0 0.0
  %1639 = vmatprep.subr.mxu0 0.0
  %1640 = vmatpush2.xpose.msra.mxu0 0.0
  %1641 = vmatprep.subr.mxu0 0.0
  %1642 = vmatpush2.xpose.msra.mxu0 0.0
  %1643 = vmatprep.subr.mxu0 0.0
  %1644 = vmatpush2.xpose.msra.mxu0 0.0
  %1645 = vmatprep.subr.mxu0 0.0
  %1646 = vmatpush2.xpose.msra.mxu0 0.0
  %1647 = vmatprep.subr.mxu0 0.0
  %1648 = vmatpush2.xpose.msra.mxu0 0.0
  %1649 = vmatprep.subr.mxu0 0.0
  %1650 = vmatpush2.xpose.msra.mxu0 0.0
  %1651 = vmatprep.subr.mxu0 0.0
  %1652 = vmatpush2.xpose.msra.mxu0 0.0
  %1653 = vmatprep.subr.mxu0 0.0
  %1654 = vmatpush2.xpose.msra.mxu0 0.0
  %1655 = vmatprep.subr.mxu0 0.0
  %1656 = vmatpush2.xpose.msra.mxu0 0.0
  %1657 = vmatprep.subr.mxu0 0.0
  %1658 = vmatpush2.xpose.msra.mxu0 0.0
  %1659 = vmatprep.subr.mxu0 0.0
  %1660 = vmatpush2.xpose.msra.mxu0 0.0
  %1661 = vmatprep.subr.mxu0 0.0
  %1662 = vmatpush2.xpose.msra.mxu0 0.0
  %1663 = vmatprep.subr.mxu0 0.0
  %1664 = vmatpush2.xpose.msra.mxu0 0.0
  %1665 = vmatprep.subr.mxu0 0.0
  %1666 = vmatpush2.xpose.msra.mxu0 0.0
  %1667 = vmatprep.mubr.f32.mxu0 0.0
  %1668 = vmatmul.mubr.f32.gmra.mxu0 %v1553
  %v1669 = vpop.f32.mrf.mxu0
  %v1670 = vadd.f32 0.0, %v1669
  %v1671 = vpop.f32.mrf.mxu0
  %1672 = vdwg.mxu0
  %v1673 = vld [vmem:[%s8] sm:$0x1]
  %v1675 = vlaneseq
  %v1676 = vshrl.u32 %v1675, 7
  %v1677 = vsub.s32 0, %v1676
  %v1678 = vrot.slane %v1673, %v1677
  %v1680 = vmul.f32 %v1488, %v1678
  %v1681 = vmul.f32 %v1491, %v1678
  %v1682 = vmul.f32 %v1496, %v1678
  %v1683 = vmul.f32 %v1499, %v1678
  %v1684 = vmul.f32 %v1504, %v1678
  %v1685 = vmul.f32 %v1507, %v1678
  %v1686 = vmul.f32 %v1512, %v1678
  %v1687 = vmul.f32 %v1515, %v1678
  %v1688 = vmul.f32 %v1520, %v1678
  %v1689 = vmul.f32 %v1523, %v1678
  %v1690 = vmul.f32 %v1528, %v1678
  %v1691 = vmul.f32 %v1531, %v1678
  %v1692 = vmul.f32 %v1536, %v1678
  %v1693 = vmul.f32 %v1539, %v1678
  %v1694 = vmul.f32 %v1544, %v1678
  %v1695 = vmul.f32 %v1547, %v1678
  %v1696 = vsel %vm1551, %v1680, 0.0
  %1697 = vadd.xlane.f32.xlu0 %v1696
  %v1698 = vpop.xlane.xlu0 %1697
  %v1699 = vsel %vm1551, %v1681, 0.0
  %1700 = vadd.xlane.f32.xlu0 %v1699
  %v1701 = vpop.xlane.xlu0 %1700
  %v1702 = vsel %vm1551, %v1682, 0.0
  %1703 = vadd.xlane.f32.xlu0 %v1702
  %v1704 = vpop.xlane.xlu0 %1703
  %v1705 = vsel %vm1551, %v1683, 0.0
  %1706 = vadd.xlane.f32.xlu0 %v1705
  %v1707 = vpop.xlane.xlu0 %1706
  %v1708 = vsel %vm1551, %v1684, 0.0
  %1709 = vadd.xlane.f32.xlu0 %v1708
  %v1710 = vpop.xlane.xlu0 %1709
  %v1711 = vsel %vm1551, %v1685, 0.0
  %1712 = vadd.xlane.f32.xlu0 %v1711
  %v1713 = vpop.xlane.xlu0 %1712
  %v1714 = vsel %vm1551, %v1686, 0.0
  %1715 = vadd.xlane.f32.xlu0 %v1714
  %v1716 = vpop.xlane.xlu0 %1715
  %v1717 = vsel %vm1551, %v1687, 0.0
  %1718 = vadd.xlane.f32.xlu0 %v1717
  %v1719 = vpop.xlane.xlu0 %1718
  %v1720 = vsel %vm1551, %v1688, 0.0
  %1721 = vadd.xlane.f32.xlu0 %v1720
  %v1722 = vpop.xlane.xlu0 %1721
  %v1723 = vsel %vm1551, %v1689, 0.0
  %1724 = vadd.xlane.f32.xlu0 %v1723
  %v1725 = vpop.xlane.xlu0 %1724
  %v1726 = vsel %vm1551, %v1690, 0.0
  %1727 = vadd.xlane.f32.xlu0 %v1726
  %v1728 = vpop.xlane.xlu0 %1727
  %v1729 = vsel %vm1551, %v1691, 0.0
  %1730 = vadd.xlane.f32.xlu0 %v1729
  %v1731 = vpop.xlane.xlu0 %1730
  %v1732 = vsel %vm1551, %v1692, 0.0
  %1733 = vadd.xlane.f32.xlu0 %v1732
  %v1734 = vpop.xlane.xlu0 %1733
  %v1735 = vsel %vm1551, %v1693, 0.0
  %1736 = vadd.xlane.f32.xlu0 %v1735
  %v1737 = vpop.xlane.xlu0 %1736
  %v1738 = vsel %vm1551, %v1694, 0.0
  %1739 = vadd.xlane.f32.xlu0 %v1738
  %v1740 = vpop.xlane.xlu0 %1739
  %v1741 = vsel %vm1551, %v1695, 0.0
  %1742 = vadd.xlane.f32.xlu0 %v1741
  %v1743 = vpop.xlane.xlu0 %1742
  %v1744 = vlaneseq
  %v1745 = vshrl.u32 %v1744, 7
  %v1746 = vsub.s32 0, %v1745
  %v1747 = vrot.slane %v1670, %v1746
  %v1748 = vadd.f32 %v1698, %v1747
  %v1749 = vadd.f32 %v1701, %v1747
  %v1750 = vadd.f32 %v1704, %v1747
  %v1751 = vadd.f32 %v1707, %v1747
  %v1752 = vadd.f32 %v1710, %v1747
  %v1753 = vadd.f32 %v1713, %v1747
  %v1754 = vadd.f32 %v1716, %v1747
  %v1755 = vadd.f32 %v1719, %v1747
  %v1756 = vadd.f32 %v1722, %v1747
  %v1757 = vadd.f32 %v1725, %v1747
  %v1758 = vadd.f32 %v1728, %v1747
  %v1759 = vadd.f32 %v1731, %v1747
  %v1760 = vadd.f32 %v1734, %v1747
  %v1761 = vadd.f32 %v1737, %v1747
  %v1762 = vadd.f32 %v1740, %v1747
  %v1763 = vadd.f32 %v1743, %v1747
  %v1764 = vmul.f32 %v1748, 0.2
  %v1765 = vmul.f32 %v1749, 0.2
  %v1766 = vmul.f32 %v1750, 0.2
  %v1767 = vmul.f32 %v1751, 0.2
  %v1768 = vmul.f32 %v1752, 0.2
  %v1769 = vmul.f32 %v1753, 0.2
  %v1770 = vmul.f32 %v1754, 0.2
  %v1771 = vmul.f32 %v1755, 0.2
  %v1772 = vmul.f32 %v1756, 0.2
  %v1773 = vmul.f32 %v1757, 0.2
  %v1774 = vmul.f32 %v1758, 0.2
  %v1775 = vmul.f32 %v1759, 0.2
  %v1776 = vmul.f32 %v1760, 0.2
  %v1777 = vmul.f32 %v1761, 0.2
  %v1778 = vmul.f32 %v1762, 0.2
  %v1779 = vmul.f32 %v1763, 0.2
  %v1780 = vmax.f32 %v1748, %v1764
  %v1781 = vmax.f32 %v1749, %v1765
  %v1782 = vmax.f32 %v1750, %v1766
  %v1783 = vmax.f32 %v1751, %v1767
  %v1784 = vmax.f32 %v1752, %v1768
  %v1785 = vmax.f32 %v1753, %v1769
  %v1786 = vmax.f32 %v1754, %v1770
  %v1787 = vmax.f32 %v1755, %v1771
  %v1788 = vmax.f32 %v1756, %v1772
  %v1789 = vmax.f32 %v1757, %v1773
  %v1790 = vmax.f32 %v1758, %v1774
  %v1791 = vmax.f32 %v1759, %v1775
  %v1792 = vmax.f32 %v1760, %v1776
  %v1793 = vmax.f32 %v1761, %v1777
  %v1794 = vmax.f32 %v1762, %v1778
  %v1795 = vmax.f32 %v1763, %v1779
  %v1796 = vadd.f32 %v1780, %v71
  %v1797 = vadd.f32 %v1781, %v72
  %v1798 = vadd.f32 %v1782, %v73
  %v1799 = vadd.f32 %v1783, %v74
  %v1800 = vadd.f32 %v1784, %v75
  %v1801 = vadd.f32 %v1785, %v76
  %v1802 = vadd.f32 %v1786, %v77
  %v1803 = vadd.f32 %v1787, %v78
  %v1804 = vadd.f32 %v1788, %v79
  %v1805 = vadd.f32 %v1789, %v80
  %v1806 = vadd.f32 %v1790, %v81
  %v1807 = vadd.f32 %v1791, %v82
  %v1808 = vadd.f32 %v1792, %v83
  %v1809 = vadd.f32 %v1793, %v84
  %v1810 = vadd.f32 %v1794, %v85
  %v1811 = vadd.f32 %v1795, %v86
  %1812 = vmax.xlane.f32.xlu0 %v1796
  %v1813 = vpop.xlane.xlu0 %1812
  %1814 = vmax.xlane.f32.xlu0 %v1797
  %v1815 = vpop.xlane.xlu0 %1814
  %1816 = vmax.xlane.f32.xlu0 %v1798
  %v1817 = vpop.xlane.xlu0 %1816
  %1818 = vmax.xlane.f32.xlu0 %v1799
  %v1819 = vpop.xlane.xlu0 %1818
  %1820 = vmax.xlane.f32.xlu0 %v1800
  %v1821 = vpop.xlane.xlu0 %1820
  %1822 = vmax.xlane.f32.xlu0 %v1801
  %v1823 = vpop.xlane.xlu0 %1822
  %1824 = vmax.xlane.f32.xlu0 %v1802
  %v1825 = vpop.xlane.xlu0 %1824
  %1826 = vmax.xlane.f32.xlu0 %v1803
  %v1827 = vpop.xlane.xlu0 %1826
  %1828 = vmax.xlane.f32.xlu0 %v1804
  %v1829 = vpop.xlane.xlu0 %1828
  %1830 = vmax.xlane.f32.xlu0 %v1805
  %v1831 = vpop.xlane.xlu0 %1830
  %1832 = vmax.xlane.f32.xlu0 %v1806
  %v1833 = vpop.xlane.xlu0 %1832
  %1834 = vmax.xlane.f32.xlu0 %v1807
  %v1835 = vpop.xlane.xlu0 %1834
  %1836 = vmax.xlane.f32.xlu0 %v1808
  %v1837 = vpop.xlane.xlu0 %1836
  %1838 = vmax.xlane.f32.xlu0 %v1809
  %v1839 = vpop.xlane.xlu0 %1838
  %1840 = vmax.xlane.f32.xlu0 %v1810
  %v1841 = vpop.xlane.xlu0 %1840
  %1842 = vmax.xlane.f32.xlu0 %v1811
  %v1843 = vpop.xlane.xlu0 %1842
  %v1844 = vsub.f32 %v1796, %v1813
  %v1845 = vsub.f32 %v1797, %v1815
  %v1846 = vsub.f32 %v1798, %v1817
  %v1847 = vsub.f32 %v1799, %v1819
  %v1848 = vsub.f32 %v1800, %v1821
  %v1849 = vsub.f32 %v1801, %v1823
  %v1850 = vsub.f32 %v1802, %v1825
  %v1851 = vsub.f32 %v1803, %v1827
  %v1852 = vsub.f32 %v1804, %v1829
  %v1853 = vsub.f32 %v1805, %v1831
  %v1854 = vsub.f32 %v1806, %v1833
  %v1855 = vsub.f32 %v1807, %v1835
  %v1856 = vsub.f32 %v1808, %v1837
  %v1857 = vsub.f32 %v1809, %v1839
  %v1858 = vsub.f32 %v1810, %v1841
  %v1859 = vsub.f32 %v1811, %v1843
  %v1860 = vmul.f32 %v1844, 1.442695
  %v1861 = vpow.pop %v1860
  %v1862 = vmul.f32 %v1845, 1.442695
  %v1863 = vpow.pop %v1862
  %v1864 = vmul.f32 %v1846, 1.442695
  %v1865 = vpow.pop %v1864
  %v1866 = vmul.f32 %v1847, 1.442695
  %v1867 = vpow.pop %v1866
  %v1868 = vmul.f32 %v1848, 1.442695
  %v1869 = vpow.pop %v1868
  %v1870 = vmul.f32 %v1849, 1.442695
  %v1871 = vpow.pop %v1870
  %v1872 = vmul.f32 %v1850, 1.442695
  %v1873 = vpow.pop %v1872
  %v1874 = vmul.f32 %v1851, 1.442695
  %v1875 = vpow.pop %v1874
  %v1876 = vmul.f32 %v1852, 1.442695
  %v1877 = vpow.pop %v1876
  %v1878 = vmul.f32 %v1853, 1.442695
  %v1879 = vpow.pop %v1878
  %v1880 = vmul.f32 %v1854, 1.442695
  %v1881 = vpow.pop %v1880
  %v1882 = vmul.f32 %v1855, 1.442695
  %v1883 = vpow.pop %v1882
  %v1884 = vmul.f32 %v1856, 1.442695
  %v1885 = vpow.pop %v1884
  %v1886 = vmul.f32 %v1857, 1.442695
  %v1887 = vpow.pop %v1886
  %v1888 = vmul.f32 %v1858, 1.442695
  %v1889 = vpow.pop %v1888
  %v1890 = vmul.f32 %v1859, 1.442695
  %v1891 = vpow.pop %v1890
  %1892 = vadd.xlane.f32.xlu0 %v1861
  %v1893 = vpop.xlane.xlu0 %1892
  %1894 = vadd.xlane.f32.xlu0 %v1863
  %v1895 = vpop.xlane.xlu0 %1894
  %1896 = vadd.xlane.f32.xlu0 %v1865
  %v1897 = vpop.xlane.xlu0 %1896
  %1898 = vadd.xlane.f32.xlu0 %v1867
  %v1899 = vpop.xlane.xlu0 %1898
  %1900 = vadd.xlane.f32.xlu0 %v1869
  %v1901 = vpop.xlane.xlu0 %1900
  %1902 = vadd.xlane.f32.xlu0 %v1871
  %v1903 = vpop.xlane.xlu0 %1902
  %1904 = vadd.xlane.f32.xlu0 %v1873
  %v1905 = vpop.xlane.xlu0 %1904
  %1906 = vadd.xlane.f32.xlu0 %v1875
  %v1907 = vpop.xlane.xlu0 %1906
  %1908 = vadd.xlane.f32.xlu0 %v1877
  %v1909 = vpop.xlane.xlu0 %1908
  %1910 = vadd.xlane.f32.xlu0 %v1879
  %v1911 = vpop.xlane.xlu0 %1910
  %1912 = vadd.xlane.f32.xlu0 %v1881
  %v1913 = vpop.xlane.xlu0 %1912
  %1914 = vadd.xlane.f32.xlu0 %v1883
  %v1915 = vpop.xlane.xlu0 %1914
  %1916 = vadd.xlane.f32.xlu0 %v1885
  %v1917 = vpop.xlane.xlu0 %1916
  %1918 = vadd.xlane.f32.xlu0 %v1887
  %v1919 = vpop.xlane.xlu0 %1918
  %1920 = vadd.xlane.f32.xlu0 %v1889
  %v1921 = vpop.xlane.xlu0 %1920
  %1922 = vadd.xlane.f32.xlu0 %v1891
  %v1923 = vpop.xlane.xlu0 %1922
  %v1924 = vmax.f32 %v1893, 1e-20
  %v1925 = vmax.f32 %v1895, 1e-20
  %v1926 = vmax.f32 %v1897, 1e-20
  %v1927 = vmax.f32 %v1899, 1e-20
  %v1928 = vmax.f32 %v1901, 1e-20
  %v1929 = vmax.f32 %v1903, 1e-20
  %v1930 = vmax.f32 %v1905, 1e-20
  %v1931 = vmax.f32 %v1907, 1e-20
  %v1932 = vmax.f32 %v1909, 1e-20
  %v1933 = vmax.f32 %v1911, 1e-20
  %v1934 = vmax.f32 %v1913, 1e-20
  %v1935 = vmax.f32 %v1915, 1e-20
  %v1936 = vmax.f32 %v1917, 1e-20
  %v1937 = vmax.f32 %v1919, 1e-20
  %v1938 = vmax.f32 %v1921, 1e-20
  %v1939 = vmax.f32 %v1923, 1e-20
  %v1940 = vrcp.pop %v1924
  %v1941 = vrcp.pop %v1925
  %v1942 = vrcp.pop %v1926
  %v1943 = vrcp.pop %v1927
  %v1944 = vrcp.pop %v1928
  %v1945 = vrcp.pop %v1929
  %v1946 = vrcp.pop %v1930
  %v1947 = vrcp.pop %v1931
  %v1948 = vrcp.pop %v1932
  %v1949 = vrcp.pop %v1933
  %v1950 = vrcp.pop %v1934
  %v1951 = vrcp.pop %v1935
  %v1952 = vrcp.pop %v1936
  %v1953 = vrcp.pop %v1937
  %v1954 = vrcp.pop %v1938
  %v1955 = vrcp.pop %v1939
  %v1956 = vmul.f32 %v1861, %v1940
  %v1957 = vmul.f32 %v1863, %v1941
  %v1958 = vmul.f32 %v1865, %v1942
  %v1959 = vmul.f32 %v1867, %v1943
  %v1960 = vmul.f32 %v1869, %v1944
  %v1961 = vmul.f32 %v1871, %v1945
  %v1962 = vmul.f32 %v1873, %v1946
  %v1963 = vmul.f32 %v1875, %v1947
  %v1964 = vmul.f32 %v1877, %v1948
  %v1965 = vmul.f32 %v1879, %v1949
  %v1966 = vmul.f32 %v1881, %v1950
  %v1967 = vmul.f32 %v1883, %v1951
  %v1968 = vmul.f32 %v1885, %v1952
  %v1969 = vmul.f32 %v1887, %v1953
  %v1970 = vmul.f32 %v1889, %v1954
  %v1971 = vmul.f32 %v1891, %v1955
  %v1972 = vpack.c.bf16 %v1957, %v1956
  %v1973 = vpack.c.bf16 %v1959, %v1958
  %v1974 = vpack.c.bf16 %v1961, %v1960
  %v1975 = vpack.c.bf16 %v1963, %v1962
  %v1976 = vpack.c.bf16 %v1965, %v1964
  %v1977 = vpack.c.bf16 %v1967, %v1966
  %v1978 = vpack.c.bf16 %v1969, %v1968
  %v1979 = vpack.c.bf16 %v1971, %v1970
  %v1980 = vpack.c.bf16 %v1491, %v1488
  %v1981 = vpack.c.bf16 %v1499, %v1496
  %v1982 = vpack.c.bf16 %v1507, %v1504
  %v1983 = vpack.c.bf16 %v1515, %v1512
  %v1984 = vpack.c.bf16 %v1523, %v1520
  %v1985 = vpack.c.bf16 %v1531, %v1528
  %v1986 = vpack.c.bf16 %v1539, %v1536
  %v1987 = vpack.c.bf16 %v1547, %v1544
  %v1988 = vld [vmem:[%s9] sm:$0x1]
  %v1990 = vlaneseq
  %v1991 = vshrl.u32 %v1990, 7
  %v1992 = vsub.s32 0, %v1991
  %v1993 = vrot.slane %v1988, %v1992
  %1995 = vmatprep.subr.bf16.mxu0 0
  %1996 = vmatpush1.bf16.msra.mxu0 %v1987
  %1997 = vmatprep.subr.bf16.mxu0 0
  %1998 = vmatpush1.bf16.msra.mxu0 %v1986
  %1999 = vmatprep.subr.bf16.mxu0 0
  %2000 = vmatpush1.bf16.msra.mxu0 %v1985
  %2001 = vmatprep.subr.bf16.mxu0 0
  %2002 = vmatpush1.bf16.msra.mxu0 %v1984
  %2003 = vmatprep.subr.bf16.mxu0 0
  %2004 = vmatpush1.bf16.msra.mxu0 %v1983
  %2005 = vmatprep.subr.bf16.mxu0 0
  %2006 = vmatpush1.bf16.msra.mxu0 %v1982
  %2007 = vmatprep.subr.bf16.mxu0 0
  %2008 = vmatpush1.bf16.msra.mxu0 %v1981
  %2009 = vmatprep.subr.bf16.mxu0 0
  %2010 = vmatpush1.bf16.msra.mxu0 %v1980
  %2011 = vmatprep.subr.bf16.mxu0 0
  %2012 = vmatpush2.bf16.msra.mxu0 0
  %2013 = vmatprep.subr.bf16.mxu0 0
  %2014 = vmatpush2.bf16.msra.mxu0 0
  %2015 = vmatprep.subr.bf16.mxu0 0
  %2016 = vmatpush2.bf16.msra.mxu0 0
  %2017 = vmatprep.subr.bf16.mxu0 0
  %2018 = vmatpush2.bf16.msra.mxu0 0
  %2019 = vmatprep.subr.bf16.mxu0 0
  %2020 = vmatpush2.bf16.msra.mxu0 0
  %2021 = vmatprep.subr.bf16.mxu0 0
  %2022 = vmatpush2.bf16.msra.mxu0 0
  %2023 = vmatprep.subr.bf16.mxu0 0
  %2024 = vmatpush2.bf16.msra.mxu0 0
  %2025 = vmatprep.subr.bf16.mxu0 0
  %2026 = vmatpush2.bf16.msra.mxu0 0
  %2027 = vmatprep.mubr.bf16.mxu0 0
  %2028 = vmatmul.mubr.bf16.gmra.mxu0 %v1972
  %v2029 = vpop.f32.mrf.mxu0
  %v2030 = vadd.f32 %v1993, %v2029
  %v2031 = vpop.f32.mrf.mxu0
  %v2032 = vpop.f32.mrf.mxu0
  %v2033 = vadd.f32 %v1993, %v2032
  %v2034 = vpop.f32.mrf.mxu0
  %2035 = vmatprep.mubr.bf16.mxu0 0
  %2036 = vmatmul.mubr.bf16.gmra.mxu0 %v1973
  %v2037 = vpop.f32.mrf.mxu0
  %v2038 = vadd.f32 %v1993, %v2037
  %v2039 = vpop.f32.mrf.mxu0
  %v2040 = vpop.f32.mrf.mxu0
  %v2041 = vadd.f32 %v1993, %v2040
  %v2042 = vpop.f32.mrf.mxu0
  %2043 = vmatprep.mubr.bf16.mxu0 0
  %2044 = vmatmul.mubr.bf16.gmra.mxu0 %v1974
  %v2045 = vpop.f32.mrf.mxu0
  %v2046 = vadd.f32 %v1993, %v2045
  %v2047 = vpop.f32.mrf.mxu0
  %v2048 = vpop.f32.mrf.mxu0
  %v2049 = vadd.f32 %v1993, %v2048
  %v2050 = vpop.f32.mrf.mxu0
  %2051 = vmatprep.mubr.bf16.mxu0 0
  %2052 = vmatmul.mubr.bf16.gmra.mxu0 %v1975
  %v2053 = vpop.f32.mrf.mxu0
  %v2054 = vadd.f32 %v1993, %v2053
  %v2055 = vpop.f32.mrf.mxu0
  %v2056 = vpop.f32.mrf.mxu0
  %v2057 = vadd.f32 %v1993, %v2056
  %v2058 = vpop.f32.mrf.mxu0
  %2059 = vmatprep.mubr.bf16.mxu0 0
  %2060 = vmatmul.mubr.bf16.gmra.mxu0 %v1976
  %v2061 = vpop.f32.mrf.mxu0
  %v2062 = vadd.f32 %v1993, %v2061
  %v2063 = vpop.f32.mrf.mxu0
  %v2064 = vpop.f32.mrf.mxu0
  %v2065 = vadd.f32 %v1993, %v2064
  %v2066 = vpop.f32.mrf.mxu0
  %2067 = vmatprep.mubr.bf16.mxu0 0
  %2068 = vmatmul.mubr.bf16.gmra.mxu0 %v1977
  %v2069 = vpop.f32.mrf.mxu0
  %v2070 = vadd.f32 %v1993, %v2069
  %v2071 = vpop.f32.mrf.mxu0
  %v2072 = vpop.f32.mrf.mxu0
  %v2073 = vadd.f32 %v1993, %v2072
  %v2074 = vpop.f32.mrf.mxu0
  %2075 = vmatprep.mubr.bf16.mxu0 0
  %2076 = vmatmul.mubr.bf16.gmra.mxu0 %v1978
  %v2077 = vpop.f32.mrf.mxu0
  %v2078 = vadd.f32 %v1993, %v2077
  %v2079 = vpop.f32.mrf.mxu0
  %v2080 = vpop.f32.mrf.mxu0
  %v2081 = vadd.f32 %v1993, %v2080
  %v2082 = vpop.f32.mrf.mxu0
  %2083 = vmatprep.mubr.bf16.mxu0 0
  %2084 = vmatmul.mubr.bf16.gmra.mxu0 %v1979
  %v2085 = vpop.f32.mrf.mxu0
  %v2086 = vadd.f32 %v1993, %v2085
  %v2087 = vpop.f32.mrf.mxu0
  %v2088 = vpop.f32.mrf.mxu0
  %v2089 = vadd.f32 %v1993, %v2088
  %v2090 = vpop.f32.mrf.mxu0
  %2091 = vdwg.mxu0
  %v2092 = vsel %vm1551, %v2030, -inf
  %2093 = vmax.xlane.f32.xlu0 %v2092
  %v2094 = vpop.xlane.xlu0 %2093
  %v2095 = vsel %vm1551, %v2033, -inf
  %2096 = vmax.xlane.f32.xlu0 %v2095
  %v2097 = vpop.xlane.xlu0 %2096
  %v2098 = vsel %vm1551, %v2038, -inf
  %2099 = vmax.xlane.f32.xlu0 %v2098
  %v2100 = vpop.xlane.xlu0 %2099
  %v2101 = vsel %vm1551, %v2041, -inf
  %2102 = vmax.xlane.f32.xlu0 %v2101
  %v2103 = vpop.xlane.xlu0 %2102
  %v2104 = vsel %vm1551, %v2046, -inf
  %2105 = vmax.xlane.f32.xlu0 %v2104
  %v2106 = vpop.xlane.xlu0 %2105
  %v2107 = vsel %vm1551, %v2049, -inf
  %2108 = vmax.xlane.f32.xlu0 %v2107
  %v2109 = vpop.xlane.xlu0 %2108
  %v2110 = vsel %vm1551, %v2054, -inf
  %2111 = vmax.xlane.f32.xlu0 %v2110
  %v2112 = vpop.xlane.xlu0 %2111
  %v2113 = vsel %vm1551, %v2057, -inf
  %2114 = vmax.xlane.f32.xlu0 %v2113
  %v2115 = vpop.xlane.xlu0 %2114
  %v2116 = vsel %vm1551, %v2062, -inf
  %2117 = vmax.xlane.f32.xlu0 %v2116
  %v2118 = vpop.xlane.xlu0 %2117
  %v2119 = vsel %vm1551, %v2065, -inf
  %2120 = vmax.xlane.f32.xlu0 %v2119
  %v2121 = vpop.xlane.xlu0 %2120
  %v2122 = vsel %vm1551, %v2070, -inf
  %2123 = vmax.xlane.f32.xlu0 %v2122
  %v2124 = vpop.xlane.xlu0 %2123
  %v2125 = vsel %vm1551, %v2073, -inf
  %2126 = vmax.xlane.f32.xlu0 %v2125
  %v2127 = vpop.xlane.xlu0 %2126
  %v2128 = vsel %vm1551, %v2078, -inf
  %2129 = vmax.xlane.f32.xlu0 %v2128
  %v2130 = vpop.xlane.xlu0 %2129
  %v2131 = vsel %vm1551, %v2081, -inf
  %2132 = vmax.xlane.f32.xlu0 %v2131
  %v2133 = vpop.xlane.xlu0 %2132
  %v2134 = vsel %vm1551, %v2086, -inf
  %2135 = vmax.xlane.f32.xlu0 %v2134
  %v2136 = vpop.xlane.xlu0 %2135
  %v2137 = vsel %vm1551, %v2089, -inf
  %2138 = vmax.xlane.f32.xlu0 %v2137
  %v2139 = vpop.xlane.xlu0 %2138
  %v2140 = vsub.f32 %v2030, %v2094
  %v2141 = vsub.f32 %v2033, %v2097
  %v2142 = vsub.f32 %v2038, %v2100
  %v2143 = vsub.f32 %v2041, %v2103
  %v2144 = vsub.f32 %v2046, %v2106
  %v2145 = vsub.f32 %v2049, %v2109
  %v2146 = vsub.f32 %v2054, %v2112
  %v2147 = vsub.f32 %v2057, %v2115
  %v2148 = vsub.f32 %v2062, %v2118
  %v2149 = vsub.f32 %v2065, %v2121
  %v2150 = vsub.f32 %v2070, %v2124
  %v2151 = vsub.f32 %v2073, %v2127
  %v2152 = vsub.f32 %v2078, %v2130
  %v2153 = vsub.f32 %v2081, %v2133
  %v2154 = vsub.f32 %v2086, %v2136
  %v2155 = vsub.f32 %v2089, %v2139
  %v2156 = vmul.f32 %v2140, 1.442695
  %v2157 = vpow.pop %v2156
  %v2158 = vmul.f32 %v2141, 1.442695
  %v2159 = vpow.pop %v2158
  %v2160 = vmul.f32 %v2142, 1.442695
  %v2161 = vpow.pop %v2160
  %v2162 = vmul.f32 %v2143, 1.442695
  %v2163 = vpow.pop %v2162
  %v2164 = vmul.f32 %v2144, 1.442695
  %v2165 = vpow.pop %v2164
  %v2166 = vmul.f32 %v2145, 1.442695
  %v2167 = vpow.pop %v2166
  %v2168 = vmul.f32 %v2146, 1.442695
  %v2169 = vpow.pop %v2168
  %v2170 = vmul.f32 %v2147, 1.442695
  %v2171 = vpow.pop %v2170
  %v2172 = vmul.f32 %v2148, 1.442695
  %v2173 = vpow.pop %v2172
  %v2174 = vmul.f32 %v2149, 1.442695
  %v2175 = vpow.pop %v2174
  %v2176 = vmul.f32 %v2150, 1.442695
  %v2177 = vpow.pop %v2176
  %v2178 = vmul.f32 %v2151, 1.442695
  %v2179 = vpow.pop %v2178
  %v2180 = vmul.f32 %v2152, 1.442695
  %v2181 = vpow.pop %v2180
  %v2182 = vmul.f32 %v2153, 1.442695
  %v2183 = vpow.pop %v2182
  %v2184 = vmul.f32 %v2154, 1.442695
  %v2185 = vpow.pop %v2184
  %v2186 = vmul.f32 %v2155, 1.442695
  %v2187 = vpow.pop %v2186
  %v2188 = vsel %vm1551, %v2157, 0.0
  %2189 = vadd.xlane.f32.xlu0 %v2188
  %v2190 = vpop.xlane.xlu0 %2189
  %v2191 = vsel %vm1551, %v2159, 0.0
  %2192 = vadd.xlane.f32.xlu0 %v2191
  %v2193 = vpop.xlane.xlu0 %2192
  %v2194 = vsel %vm1551, %v2161, 0.0
  %2195 = vadd.xlane.f32.xlu0 %v2194
  %v2196 = vpop.xlane.xlu0 %2195
  %v2197 = vsel %vm1551, %v2163, 0.0
  %2198 = vadd.xlane.f32.xlu0 %v2197
  %v2199 = vpop.xlane.xlu0 %2198
  %v2200 = vsel %vm1551, %v2165, 0.0
  %2201 = vadd.xlane.f32.xlu0 %v2200
  %v2202 = vpop.xlane.xlu0 %2201
  %v2203 = vsel %vm1551, %v2167, 0.0
  %2204 = vadd.xlane.f32.xlu0 %v2203
  %v2205 = vpop.xlane.xlu0 %2204
  %v2206 = vsel %vm1551, %v2169, 0.0
  %2207 = vadd.xlane.f32.xlu0 %v2206
  %v2208 = vpop.xlane.xlu0 %2207
  %v2209 = vsel %vm1551, %v2171, 0.0
  %2210 = vadd.xlane.f32.xlu0 %v2209
  %v2211 = vpop.xlane.xlu0 %2210
  %v2212 = vsel %vm1551, %v2173, 0.0
  %2213 = vadd.xlane.f32.xlu0 %v2212
  %v2214 = vpop.xlane.xlu0 %2213
  %v2215 = vsel %vm1551, %v2175, 0.0
  %2216 = vadd.xlane.f32.xlu0 %v2215
  %v2217 = vpop.xlane.xlu0 %2216
  %v2218 = vsel %vm1551, %v2177, 0.0
  %2219 = vadd.xlane.f32.xlu0 %v2218
  %v2220 = vpop.xlane.xlu0 %2219
  %v2221 = vsel %vm1551, %v2179, 0.0
  %2222 = vadd.xlane.f32.xlu0 %v2221
  %v2223 = vpop.xlane.xlu0 %2222
  %v2224 = vsel %vm1551, %v2181, 0.0
  %2225 = vadd.xlane.f32.xlu0 %v2224
  %v2226 = vpop.xlane.xlu0 %2225
  %v2227 = vsel %vm1551, %v2183, 0.0
  %2228 = vadd.xlane.f32.xlu0 %v2227
  %v2229 = vpop.xlane.xlu0 %2228
  %v2230 = vsel %vm1551, %v2185, 0.0
  %2231 = vadd.xlane.f32.xlu0 %v2230
  %v2232 = vpop.xlane.xlu0 %2231
  %v2233 = vsel %vm1551, %v2187, 0.0
  %2234 = vadd.xlane.f32.xlu0 %v2233
  %v2235 = vpop.xlane.xlu0 %2234
  %v2236 = vlog2.pop %v2190
  %v2237 = vmul.f32 %v2236, 0.6931472
  %v2238 = vlog2.pop %v2193
  %v2239 = vmul.f32 %v2238, 0.6931472
  %v2240 = vlog2.pop %v2196
  %v2241 = vmul.f32 %v2240, 0.6931472
  %v2242 = vlog2.pop %v2199
  %v2243 = vmul.f32 %v2242, 0.6931472
  %v2244 = vlog2.pop %v2202
  %v2245 = vmul.f32 %v2244, 0.6931472
  %v2246 = vlog2.pop %v2205
  %v2247 = vmul.f32 %v2246, 0.6931472
  %v2248 = vlog2.pop %v2208
  %v2249 = vmul.f32 %v2248, 0.6931472
  %v2250 = vlog2.pop %v2211
  %v2251 = vmul.f32 %v2250, 0.6931472
  %v2252 = vlog2.pop %v2214
  %v2253 = vmul.f32 %v2252, 0.6931472
  %v2254 = vlog2.pop %v2217
  %v2255 = vmul.f32 %v2254, 0.6931472
  %v2256 = vlog2.pop %v2220
  %v2257 = vmul.f32 %v2256, 0.6931472
  %v2258 = vlog2.pop %v2223
  %v2259 = vmul.f32 %v2258, 0.6931472
  %v2260 = vlog2.pop %v2226
  %v2261 = vmul.f32 %v2260, 0.6931472
  %v2262 = vlog2.pop %v2229
  %v2263 = vmul.f32 %v2262, 0.6931472
  %v2264 = vlog2.pop %v2232
  %v2265 = vmul.f32 %v2264, 0.6931472
  %v2266 = vlog2.pop %v2235
  %v2267 = vmul.f32 %v2266, 0.6931472
  %v2268 = vsub.f32 %v2140, %v2237
  %v2269 = vsub.f32 %v2141, %v2239
  %v2270 = vsub.f32 %v2142, %v2241
  %v2271 = vsub.f32 %v2143, %v2243
  %v2272 = vsub.f32 %v2144, %v2245
  %v2273 = vsub.f32 %v2145, %v2247
  %v2274 = vsub.f32 %v2146, %v2249
  %v2275 = vsub.f32 %v2147, %v2251
  %v2276 = vsub.f32 %v2148, %v2253
  %v2277 = vsub.f32 %v2149, %v2255
  %v2278 = vsub.f32 %v2150, %v2257
  %v2279 = vsub.f32 %v2151, %v2259
  %v2280 = vsub.f32 %v2152, %v2261
  %v2281 = vsub.f32 %v2153, %v2263
  %v2282 = vsub.f32 %v2154, %v2265
  %v2283 = vsub.f32 %v2155, %v2267
  %2284 = vst.msk [vmem:[%s11] sm:$0xff] %vm1551, %v2268
  %2285 = vst.msk [vmem:[%s11 + $0x8] sm:$0xff] %vm1551, %v2269
  %2286 = vst.msk [vmem:[%s11 + $0x10] sm:$0xff] %vm1551, %v2270
  %2287 = vst.msk [vmem:[%s11 + $0x18] sm:$0xff] %vm1551, %v2271
  %2288 = vst.msk [vmem:[%s11 + $0x20] sm:$0xff] %vm1551, %v2272
  %2289 = vst.msk [vmem:[%s11 + $0x28] sm:$0xff] %vm1551, %v2273
  %2290 = vst.msk [vmem:[%s11 + $0x30] sm:$0xff] %vm1551, %v2274
  %2291 = vst.msk [vmem:[%s11 + $0x38] sm:$0xff] %vm1551, %v2275
  %2292 = vst.msk [vmem:[%s11 + $0x40] sm:$0xff] %vm1551, %v2276
  %2293 = vst.msk [vmem:[%s11 + $0x48] sm:$0xff] %vm1551, %v2277
  %2294 = vst.msk [vmem:[%s11 + $0x50] sm:$0xff] %vm1551, %v2278
  %2295 = vst.msk [vmem:[%s11 + $0x58] sm:$0xff] %vm1551, %v2279
  %2296 = vst.msk [vmem:[%s11 + $0x60] sm:$0xff] %vm1551, %v2280
  %2297 = vst.msk [vmem:[%s11 + $0x68] sm:$0xff] %vm1551, %v2281
  %2298 = vst.msk [vmem:[%s11 + $0x70] sm:$0xff] %vm1551, %v2282
  %2299 = vst.msk [vmem:[%s11 + $0x78] sm:$0xff] %vm1551, %v2283
  // Predicated region
  $region46: #{gat_forward.1} parent=0 // pred_check
    _
  $region47: #{gat_forward.1} parent=0 // pred_check_branch
    %2301 = sbr.rel (0) target = $region49
  $region48: #{gat_forward.1} parent=0 // pred_region
    _
  $region49: #{gat_forward.1} parent=0 // pred_fallthru
    _
  // Predicated region
  $region50: #{gat_forward.1} parent=0 // pred_check
    _
  $region51: #{gat_forward.1} parent=0 // pred_check_branch
    %2303 = sbr.rel (0) target = $region53
  $region52: #{gat_forward.1} parent=0 // pred_region
    _
  $region53: #{gat_forward.1} parent=0 // pred_fallthru
    _

</llo_original>
